<compile_context>
chip_gen: v7x
topology: tpu7x:2x2x1
jax: 0.10.0
libtpu: 0.0.40
codegen_flags: <defaults>
</compile_context>

<pallas_src>
import math

import jax
import jax.numpy as jnp
from jax import lax
from jax.experimental import pallas as pl
from jax.experimental.pallas import tpu as pltpu


def _round_up(x, m):
    return (x + m - 1) // m * m


# ----------------------------------------------------------------------------
# In-kernel activation helpers (exact-erf GELU, the nn.GELU() default).
# ----------------------------------------------------------------------------
def _erf_f32(x):
    # Abramowitz & Stegun 7.1.26 rational approximation (max abs err ~1.5e-7).
    # exp and the approximate reciprocal both go to the EUP slot.
    a1, a2 = 0.254829592, -0.284496736
    a3, a4, a5 = 1.421413741, -1.453152027, 1.061405429
    p = 0.3275911
    ax = jnp.abs(x)
    t = pl.reciprocal(1.0 + p * ax, approx=True)
    poly = ((((a5 * t + a4) * t + a3) * t + a2) * t + a1) * t
    y = 1.0 - poly * jnp.exp(-ax * ax)
    return jnp.where(x >= 0.0, y, -y)


def _gelu_exact(x):
    # nn.GELU(approximate='none'): 0.5 * x * (1 + erf(x / sqrt(2)))
    return 0.5 * x * (1.0 + _erf_f32(x * (1.0 / math.sqrt(2.0))))


# ----------------------------------------------------------------------------
# Wrapper: BN folding + branch reparameterization (plain-JAX glue) and ONE
# pallas_call that does the fused 3x3 conv + bias + GELU.
# ----------------------------------------------------------------------------
def mobileone_block_forward(x_nchw, params, kernel_size=3, out_dtype=jnp.float32):
    eps = 1e-5
    K = kernel_size
    assert K == 3, "kernel specialized for the module default kernel_size=3"
    pad = K // 2

    # ---- fold each BatchNorm into (scale, bias) using running statistics ----
    def fold_bn(g, b, m, v):
        s = g / jnp.sqrt(v + eps)
        return s, b - m * s

    sk, bk = fold_bn(params["g_k"], params["b_k"], params["m_k"], params["v_k"])
    ss, bs = fold_bn(params["g_s"], params["b_s"], params["m_s"], params["v_s"])
    si, bi = fold_bn(params["g_i"], params["b_i"], params["m_i"], params["v_i"])

    # ---- exact branch reparameterization (== module.reparameterize()) -------
    wk = params["wk"].astype(jnp.float32)               # (Cout, Cin, K, K) OIHW
    w1 = params["w1"][:, :, 0, 0].astype(jnp.float32)   # (Cout, Cin)
    Cout, Cin = w1.shape

    w_fused = wk * sk[:, None, None, None]               # conv_kxk branch
    center = w1 * ss[:, None] + jnp.diag(si)             # conv_scale + identity
    w_fused = w_fused.at[:, :, pad, pad].add(center)
    bias = (bk + bs + bi).astype(jnp.float32)

    # Per-tap weight matrices, tap t = dy*K + dx: (K*K, Cout, Cin), bf16 (MXU).
    w_taps = jnp.transpose(w_fused, (2, 3, 0, 1)).reshape(K * K, Cout, Cin)
    w_taps = w_taps.astype(jnp.bfloat16)
    bias2d = bias[:, None]                                # (Cout, 1) f32

    # ---- input prep: bf16 FIRST, then a single cheap flat zero-pad ----------
    # g[n, c, 1 + r*W + col] == x_padH[n, c, r, col] (one zero row above/below,
    # 1-element front guard, zero tail up to a multiple of 128 lanes).
    # Tap (dy, dx) of flat output position p then reads g[n, :, p + dy*W + dx].
    N, C, H, W = x_nchw.shape
    assert C == Cin and Cout == Cin, "identity branch requires in_chs == out_chs"
    HW = H * W
    Lin = _round_up(HW + 2 * W + 2, 128)
    x_bf = x_nchw.astype(jnp.bfloat16)
    g = jnp.pad(x_bf.reshape(N, C, HW),
                ((0, 0), (0, 0), (1 + W, Lin - (1 + W) - HW)))

    # Column-edge masks: dx=0 taps are invalid at col 0, dx=K-1 at col W-1.
    col = jnp.arange(HW, dtype=jnp.int32) % W
    masks = jnp.stack([col != 0, col != (W - 1)]).astype(jnp.float32)  # (2, HW)

    # Whole (small) batch in one grid step; drop NB to 1 (or add an H-row tile
    # axis) once NB*(C*Lin*2 + Cout*HW*4) no longer fits VMEM comfortably.
    NB = N

    def kernel(w_ref, b_ref, m_ref, x_ref, o_ref):
        bias_v = b_ref[...]                    # (Cout, 1) f32
        mask_l = m_ref[0:1, :]                 # (1, HW)  f32
        mask_r = m_ref[1:2, :]
        for n in range(NB):
            acc = None
            for dy in range(K):
                for dx in range(K):
                    t = dy * K + dx
                    xs = x_ref[n, :, pl.ds(dy * W + dx, HW)]      # (Cin, HW) bf16
                    c = jnp.dot(w_ref[t, :, :], xs,
                                preferred_element_type=jnp.float32)
                    if dx == 0:
                        c = c * mask_l
                    elif dx == K - 1:
                        c = c * mask_r
                    acc = c if acc is None else acc + c
            out = _gelu_exact(acc + bias_v)                        # (Cout, HW) f32
            o_ref[n, :, :] = out.astype(out_dtype)

    out_flat = pl.pallas_call(
        kernel,
        out_shape=jax.ShapeDtypeStruct((N, Cout, HW), out_dtype),
        grid=(N // NB,),
        in_specs=[
            pl.BlockSpec((K * K, Cout, Cin), lambda nb: (0, 0, 0)),   # weights
            pl.BlockSpec((Cout, 1), lambda nb: (0, 0)),               # bias
            pl.BlockSpec((2, HW), lambda nb: (0, 0)),                 # edge masks
            pl.BlockSpec((NB, C, Lin), lambda nb: (nb, 0, 0)),        # images
        ],
        out_specs=pl.BlockSpec((NB, Cout, HW), lambda nb: (nb, 0, 0)),
        compiler_params=pltpu.CompilerParams(
            dimension_semantics=("parallel",)),
    )(w_taps, bias2d, masks, g)

    return out_flat.reshape(N, Cout, H, W)      # free: layout already NCHW


# ----------------------------------------------------------------------------
# Pure-JAX reference (mirrors the PyTorch multi-branch forward, eval-mode BN).
# ----------------------------------------------------------------------------
def mobileone_block_ref(x_nchw, params):
    eps = 1e-5

    def bn(y, g, b, m, v):
        inv = (g / jnp.sqrt(v + eps))[None, :, None, None]
        return (y - m[None, :, None, None]) * inv + b[None, :, None, None]

    dn = ("NCHW", "OIHW", "NCHW")
    convk = lax.conv_general_dilated(x_nchw, params["wk"], (1, 1),
                                     ((1, 1), (1, 1)), dimension_numbers=dn)
    conv1 = lax.conv_general_dilated(x_nchw, params["w1"], (1, 1),
                                     ((0, 0), (0, 0)), dimension_numbers=dn)
    kxk_out = bn(convk, params["g_k"], params["b_k"], params["m_k"], params["v_k"])
    scale_out = bn(conv1, params["g_s"], params["b_s"], params["m_s"], params["v_s"])
    id_out = bn(x_nchw, params["g_i"], params["b_i"], params["m_i"], params["v_i"])
    return jax.nn.gelu(scale_out + id_out + kxk_out, approximate=False)


def make_params(key, C, K):
    ks = jax.random.split(key, 14)
    p = {
        "wk": jax.random.normal(ks[0], (C, C, K, K), jnp.float32) * 0.1,
        "w1": jax.random.normal(ks[1], (C, C, 1, 1), jnp.float32) * 0.1,
    }
    for j, nm in enumerate(["k", "s", "i"]):   # conv_kxk BN, conv_scale BN, identity BN
        p["g_" + nm] = jax.random.uniform(ks[2 + 4 * j], (C,), jnp.float32, 0.5, 1.5)
        p["b_" + nm] = jax.random.normal(ks[3 + 4 * j], (C,), jnp.float32) * 0.1
        p["m_" + nm] = jax.random.normal(ks[4 + 4 * j], (C,), jnp.float32) * 0.1
        p["v_" + nm] = jax.random.uniform(ks[5 + 4 * j], (C,), jnp.float32, 0.5, 1.5)
    return p


if __name__ == "__main__":
    N, C, H, W = 2, 32, 16, 16
    K = 3

    key = jax.random.PRNGKey(0)
    kx, kp = jax.random.split(key)
    x = jax.random.normal(kx, (N, C, H, W), jnp.float32)
    params = make_params(kp, C, K)

    fwd = jax.jit(lambda xx, pp: mobileone_block_forward(xx, pp))
    out = jax.block_until_ready(fwd(x, params))
    ref = jax.block_until_ready(mobileone_block_ref(x, params))

    assert out.shape == (N, C, H, W), out.shape
    max_err = float(jnp.max(jnp.abs(out - ref)))
    mean_err = float(jnp.mean(jnp.abs(out - ref)))
    # bf16 matmul operands (f32 accumulation) + approx-erf epilogue vs f32 ref.
    assert max_err < 1e-1 and mean_err < 1e-2, (max_err, mean_err)

    print("KERNEL_OK")
</pallas_src>

<mosaic_0001>
module attributes {stable_mosaic.version = 11 : i64} {
  func.func @kernel(%arg0: i32, %arg1: memref<9x32x32xbf16, #tpu.memory_space<vmem>>, %arg2: memref<32x1xf32, #tpu.memory_space<vmem>>, %arg3: memref<2x256xf32, #tpu.memory_space<vmem>>, %arg4: memref<2x32x384xbf16, #tpu.memory_space<vmem>>, %arg5: memref<2x32x256xf32, #tpu.memory_space<vmem>>) attributes {dimension_semantics = [#tpu.dimension_semantics<parallel>], iteration_bounds = array<i64: 1>, scalar_prefetch = 0 : i64, scratch_operands = 0 : i64, tpu.core_type = #tpu.core_type<tc>, window_params = [{pipeline_mode = #tpu.pipeline_mode<synchronous>, transform_indices = @transform_0, window_bounds = array<i64: 9, 32, 32>}, {pipeline_mode = #tpu.pipeline_mode<synchronous>, transform_indices = @transform_1, window_bounds = array<i64: 32, 1>}, {pipeline_mode = #tpu.pipeline_mode<synchronous>, transform_indices = @transform_2, window_bounds = array<i64: 2, 256>}, {transform_indices = @transform_3, window_bounds = array<i64: 2, 32, 384>}, {transform_indices = @transform_4, window_bounds = array<i64: 2, 32, 256>}]} {
    %c0 = arith.constant 0 : index
    %c0_0 = arith.constant 0 : index
    %0 = vector.load %arg2[%c0, %c0_0] : memref<32x1xf32, #tpu.memory_space<vmem>>, vector<32x1xf32>
    %c0_1 = arith.constant 0 : index
    %c0_2 = arith.constant 0 : index
    %1 = vector.load %arg3[%c0_1, %c0_2] : memref<2x256xf32, #tpu.memory_space<vmem>>, vector<1x256xf32>
    %c1 = arith.constant 1 : index
    %c0_3 = arith.constant 0 : index
    %2 = vector.load %arg3[%c1, %c0_3] : memref<2x256xf32, #tpu.memory_space<vmem>>, vector<1x256xf32>
    %c0_4 = arith.constant 0 : index
    %c0_5 = arith.constant 0 : index
    %c0_6 = arith.constant 0 : index
    %3 = vector.load %arg4[%c0_4, %c0_5, %c0_6] : memref<2x32x384xbf16, #tpu.memory_space<vmem>>, vector<1x32x256xbf16>
    %4 = vector.shape_cast %3 : vector<1x32x256xbf16> to vector<32x256xbf16>
    %c0_7 = arith.constant 0 : index
    %c0_8 = arith.constant 0 : index
    %c0_9 = arith.constant 0 : index
    %5 = vector.load %arg1[%c0_7, %c0_8, %c0_9] : memref<9x32x32xbf16, #tpu.memory_space<vmem>>, vector<1x32x32xbf16>
    %6 = vector.shape_cast %5 : vector<1x32x32xbf16> to vector<32x32xbf16>
    %cst = arith.constant dense<0.000000e+00> : vector<32x256xf32>
    %7 = tpu.matmul %6, %4, %cst {dimension_numbers = #tpu.dot_dimension_numbers<[1], [0], [0], [1], [0, 0, 1, 1], [], []>} : vector<32x32xbf16>, vector<32x256xbf16>, vector<32x256xf32> -> vector<32x256xf32>
    %8 = vector.broadcast %1 : vector<1x256xf32> to vector<32x256xf32>
    %9 = arith.mulf %7, %8 : vector<32x256xf32>
    %c0_10 = arith.constant 0 : index
    %c0_11 = arith.constant 0 : index
    %c1_12 = arith.constant 1 : index
    %10 = vector.load %arg4[%c0_10, %c0_11, %c1_12] : memref<2x32x384xbf16, #tpu.memory_space<vmem>>, vector<1x32x256xbf16>
    %11 = vector.shape_cast %10 : vector<1x32x256xbf16> to vector<32x256xbf16>
    %c1_13 = arith.constant 1 : index
    %c0_14 = arith.constant 0 : index
    %c0_15 = arith.constant 0 : index
    %12 = vector.load %arg1[%c1_13, %c0_14, %c0_15] : memref<9x32x32xbf16, #tpu.memory_space<vmem>>, vector<1x32x32xbf16>
    %13 = vector.shape_cast %12 : vector<1x32x32xbf16> to vector<32x32xbf16>
    %cst_16 = arith.constant dense<0.000000e+00> : vector<32x256xf32>
    %14 = tpu.matmul %13, %11, %cst_16 {dimension_numbers = #tpu.dot_dimension_numbers<[1], [0], [0], [1], [0, 0, 1, 1], [], []>} : vector<32x32xbf16>, vector<32x256xbf16>, vector<32x256xf32> -> vector<32x256xf32>
    %15 = arith.addf %9, %14 : vector<32x256xf32>
    %c0_17 = arith.constant 0 : index
    %c0_18 = arith.constant 0 : index
    %c2 = arith.constant 2 : index
    %16 = vector.load %arg4[%c0_17, %c0_18, %c2] : memref<2x32x384xbf16, #tpu.memory_space<vmem>>, vector<1x32x256xbf16>
    %17 = vector.shape_cast %16 : vector<1x32x256xbf16> to vector<32x256xbf16>
    %c2_19 = arith.constant 2 : index
    %c0_20 = arith.constant 0 : index
    %c0_21 = arith.constant 0 : index
    %18 = vector.load %arg1[%c2_19, %c0_20, %c0_21] : memref<9x32x32xbf16, #tpu.memory_space<vmem>>, vector<1x32x32xbf16>
    %19 = vector.shape_cast %18 : vector<1x32x32xbf16> to vector<32x32xbf16>
    %cst_22 = arith.constant dense<0.000000e+00> : vector<32x256xf32>
    %20 = tpu.matmul %19, %17, %cst_22 {dimension_numbers = #tpu.dot_dimension_numbers<[1], [0], [0], [1], [0, 0, 1, 1], [], []>} : vector<32x32xbf16>, vector<32x256xbf16>, vector<32x256xf32> -> vector<32x256xf32>
    %21 = vector.broadcast %2 : vector<1x256xf32> to vector<32x256xf32>
    %22 = arith.mulf %20, %21 : vector<32x256xf32>
    %23 = arith.addf %15, %22 : vector<32x256xf32>
    %c0_23 = arith.constant 0 : index
    %c0_24 = arith.constant 0 : index
    %c16 = arith.constant 16 : index
    %24 = vector.load %arg4[%c0_23, %c0_24, %c16] : memref<2x32x384xbf16, #tpu.memory_space<vmem>>, vector<1x32x256xbf16>
    %25 = vector.shape_cast %24 : vector<1x32x256xbf16> to vector<32x256xbf16>
    %c3 = arith.constant 3 : index
    %c0_25 = arith.constant 0 : index
    %c0_26 = arith.constant 0 : index
    %26 = vector.load %arg1[%c3, %c0_25, %c0_26] : memref<9x32x32xbf16, #tpu.memory_space<vmem>>, vector<1x32x32xbf16>
    %27 = vector.shape_cast %26 : vector<1x32x32xbf16> to vector<32x32xbf16>
    %cst_27 = arith.constant dense<0.000000e+00> : vector<32x256xf32>
    %28 = tpu.matmul %27, %25, %cst_27 {dimension_numbers = #tpu.dot_dimension_numbers<[1], [0], [0], [1], [0, 0, 1, 1], [], []>} : vector<32x32xbf16>, vector<32x256xbf16>, vector<32x256xf32> -> vector<32x256xf32>
    %29 = vector.broadcast %1 : vector<1x256xf32> to vector<32x256xf32>
    %30 = arith.mulf %28, %29 : vector<32x256xf32>
    %31 = arith.addf %23, %30 : vector<32x256xf32>
    %c0_28 = arith.constant 0 : index
    %c0_29 = arith.constant 0 : index
    %c17 = arith.constant 17 : index
    %32 = vector.load %arg4[%c0_28, %c0_29, %c17] : memref<2x32x384xbf16, #tpu.memory_space<vmem>>, vector<1x32x256xbf16>
    %33 = vector.shape_cast %32 : vector<1x32x256xbf16> to vector<32x256xbf16>
    %c4 = arith.constant 4 : index
    %c0_30 = arith.constant 0 : index
    %c0_31 = arith.constant 0 : index
    %34 = vector.load %arg1[%c4, %c0_30, %c0_31] : memref<9x32x32xbf16, #tpu.memory_space<vmem>>, vector<1x32x32xbf16>
    %35 = vector.shape_cast %34 : vector<1x32x32xbf16> to vector<32x32xbf16>
    %cst_32 = arith.constant dense<0.000000e+00> : vector<32x256xf32>
    %36 = tpu.matmul %35, %33, %cst_32 {dimension_numbers = #tpu.dot_dimension_numbers<[1], [0], [0], [1], [0, 0, 1, 1], [], []>} : vector<32x32xbf16>, vector<32x256xbf16>, vector<32x256xf32> -> vector<32x256xf32>
    %37 = arith.addf %31, %36 : vector<32x256xf32>
    %c0_33 = arith.constant 0 : index
    %c0_34 = arith.constant 0 : index
    %c18 = arith.constant 18 : index
    %38 = vector.load %arg4[%c0_33, %c0_34, %c18] : memref<2x32x384xbf16, #tpu.memory_space<vmem>>, vector<1x32x256xbf16>
    %39 = vector.shape_cast %38 : vector<1x32x256xbf16> to vector<32x256xbf16>
    %c5 = arith.constant 5 : index
    %c0_35 = arith.constant 0 : index
    %c0_36 = arith.constant 0 : index
    %40 = vector.load %arg1[%c5, %c0_35, %c0_36] : memref<9x32x32xbf16, #tpu.memory_space<vmem>>, vector<1x32x32xbf16>
    %41 = vector.shape_cast %40 : vector<1x32x32xbf16> to vector<32x32xbf16>
    %cst_37 = arith.constant dense<0.000000e+00> : vector<32x256xf32>
    %42 = tpu.matmul %41, %39, %cst_37 {dimension_numbers = #tpu.dot_dimension_numbers<[1], [0], [0], [1], [0, 0, 1, 1], [], []>} : vector<32x32xbf16>, vector<32x256xbf16>, vector<32x256xf32> -> vector<32x256xf32>
    %43 = vector.broadcast %2 : vector<1x256xf32> to vector<32x256xf32>
    %44 = arith.mulf %42, %43 : vector<32x256xf32>
    %45 = arith.addf %37, %44 : vector<32x256xf32>
    %c0_38 = arith.constant 0 : index
    %c0_39 = arith.constant 0 : index
    %c32 = arith.constant 32 : index
    %46 = vector.load %arg4[%c0_38, %c0_39, %c32] : memref<2x32x384xbf16, #tpu.memory_space<vmem>>, vector<1x32x256xbf16>
    %47 = vector.shape_cast %46 : vector<1x32x256xbf16> to vector<32x256xbf16>
    %c6 = arith.constant 6 : index
    %c0_40 = arith.constant 0 : index
    %c0_41 = arith.constant 0 : index
    %48 = vector.load %arg1[%c6, %c0_40, %c0_41] : memref<9x32x32xbf16, #tpu.memory_space<vmem>>, vector<1x32x32xbf16>
    %49 = vector.shape_cast %48 : vector<1x32x32xbf16> to vector<32x32xbf16>
    %cst_42 = arith.constant dense<0.000000e+00> : vector<32x256xf32>
    %50 = tpu.matmul %49, %47, %cst_42 {dimension_numbers = #tpu.dot_dimension_numbers<[1], [0], [0], [1], [0, 0, 1, 1], [], []>} : vector<32x32xbf16>, vector<32x256xbf16>, vector<32x256xf32> -> vector<32x256xf32>
    %51 = vector.broadcast %1 : vector<1x256xf32> to vector<32x256xf32>
    %52 = arith.mulf %50, %51 : vector<32x256xf32>
    %53 = arith.addf %45, %52 : vector<32x256xf32>
    %c0_43 = arith.constant 0 : index
    %c0_44 = arith.constant 0 : index
    %c33 = arith.constant 33 : index
    %54 = vector.load %arg4[%c0_43, %c0_44, %c33] : memref<2x32x384xbf16, #tpu.memory_space<vmem>>, vector<1x32x256xbf16>
    %55 = vector.shape_cast %54 : vector<1x32x256xbf16> to vector<32x256xbf16>
    %c7 = arith.constant 7 : index
    %c0_45 = arith.constant 0 : index
    %c0_46 = arith.constant 0 : index
    %56 = vector.load %arg1[%c7, %c0_45, %c0_46] : memref<9x32x32xbf16, #tpu.memory_space<vmem>>, vector<1x32x32xbf16>
    %57 = vector.shape_cast %56 : vector<1x32x32xbf16> to vector<32x32xbf16>
    %cst_47 = arith.constant dense<0.000000e+00> : vector<32x256xf32>
    %58 = tpu.matmul %57, %55, %cst_47 {dimension_numbers = #tpu.dot_dimension_numbers<[1], [0], [0], [1], [0, 0, 1, 1], [], []>} : vector<32x32xbf16>, vector<32x256xbf16>, vector<32x256xf32> -> vector<32x256xf32>
    %59 = arith.addf %53, %58 : vector<32x256xf32>
    %c0_48 = arith.constant 0 : index
    %c0_49 = arith.constant 0 : index
    %c34 = arith.constant 34 : index
    %60 = vector.load %arg4[%c0_48, %c0_49, %c34] : memref<2x32x384xbf16, #tpu.memory_space<vmem>>, vector<1x32x256xbf16>
    %61 = vector.shape_cast %60 : vector<1x32x256xbf16> to vector<32x256xbf16>
    %c8 = arith.constant 8 : index
    %c0_50 = arith.constant 0 : index
    %c0_51 = arith.constant 0 : index
    %62 = vector.load %arg1[%c8, %c0_50, %c0_51] : memref<9x32x32xbf16, #tpu.memory_space<vmem>>, vector<1x32x32xbf16>
    %63 = vector.shape_cast %62 : vector<1x32x32xbf16> to vector<32x32xbf16>
    %cst_52 = arith.constant dense<0.000000e+00> : vector<32x256xf32>
    %64 = tpu.matmul %63, %61, %cst_52 {dimension_numbers = #tpu.dot_dimension_numbers<[1], [0], [0], [1], [0, 0, 1, 1], [], []>} : vector<32x32xbf16>, vector<32x256xbf16>, vector<32x256xf32> -> vector<32x256xf32>
    %65 = vector.broadcast %2 : vector<1x256xf32> to vector<32x256xf32>
    %66 = arith.mulf %64, %65 : vector<32x256xf32>
    %67 = arith.addf %59, %66 : vector<32x256xf32>
    %68 = vector.broadcast %0 : vector<32x1xf32> to vector<32x256xf32>
    %69 = arith.addf %67, %68 : vector<32x256xf32>
    %cst_53 = arith.constant 5.000000e-01 : f32
    %70 = vector.broadcast %cst_53 : f32 to vector<32x256xf32>
    %71 = arith.mulf %70, %69 : vector<32x256xf32>
    %cst_54 = arith.constant 0.707106769 : f32
    %72 = vector.broadcast %cst_54 : f32 to vector<32x256xf32>
    %73 = arith.mulf %69, %72 : vector<32x256xf32>
    %74 = math.absf %73 : vector<32x256xf32>
    %cst_55 = arith.constant 0.327591091 : f32
    %75 = vector.broadcast %cst_55 : f32 to vector<32x256xf32>
    %76 = arith.mulf %75, %74 : vector<32x256xf32>
    %cst_56 = arith.constant 1.000000e+00 : f32
    %77 = vector.broadcast %cst_56 : f32 to vector<32x256xf32>
    %78 = arith.addf %77, %76 : vector<32x256xf32>
    %79 = tpu.reciprocal %78 {approx = true} : vector<32x256xf32> -> vector<32x256xf32>
    %cst_57 = arith.constant 1.06140542 : f32
    %80 = vector.broadcast %cst_57 : f32 to vector<32x256xf32>
    %81 = arith.mulf %80, %79 : vector<32x256xf32>
    %cst_58 = arith.constant -1.45315206 : f32
    %82 = vector.broadcast %cst_58 : f32 to vector<32x256xf32>
    %83 = arith.addf %81, %82 : vector<32x256xf32>
    %84 = arith.mulf %83, %79 : vector<32x256xf32>
    %cst_59 = arith.constant 1.42141378 : f32
    %85 = vector.broadcast %cst_59 : f32 to vector<32x256xf32>
    %86 = arith.addf %84, %85 : vector<32x256xf32>
    %87 = arith.mulf %86, %79 : vector<32x256xf32>
    %cst_60 = arith.constant -0.284496725 : f32
    %88 = vector.broadcast %cst_60 : f32 to vector<32x256xf32>
    %89 = arith.addf %87, %88 : vector<32x256xf32>
    %90 = arith.mulf %89, %79 : vector<32x256xf32>
    %cst_61 = arith.constant 0.254829586 : f32
    %91 = vector.broadcast %cst_61 : f32 to vector<32x256xf32>
    %92 = arith.addf %90, %91 : vector<32x256xf32>
    %93 = arith.mulf %92, %79 : vector<32x256xf32>
    %cst_62 = arith.constant 0.000000e+00 : f32
    %94 = vector.broadcast %cst_62 : f32 to vector<32x256xf32>
    %95 = arith.subf %94, %74 : vector<32x256xf32>
    %96 = arith.mulf %95, %74 : vector<32x256xf32>
    %97 = math.exp %96 : vector<32x256xf32>
    %98 = arith.mulf %93, %97 : vector<32x256xf32>
    %cst_63 = arith.constant 1.000000e+00 : f32
    %99 = vector.broadcast %cst_63 : f32 to vector<32x256xf32>
    %100 = arith.subf %99, %98 : vector<32x256xf32>
    %cst_64 = arith.constant 0.000000e+00 : f32
    %101 = vector.broadcast %cst_64 : f32 to vector<32x256xf32>
    %102 = arith.cmpf oge, %73, %101 : vector<32x256xf32>
    %cst_65 = arith.constant 0.000000e+00 : f32
    %103 = vector.broadcast %cst_65 : f32 to vector<32x256xf32>
    %104 = arith.subf %103, %100 : vector<32x256xf32>
    %105 = arith.select %102, %100, %104 : vector<32x256xi1>, vector<32x256xf32>
    %cst_66 = arith.constant 1.000000e+00 : f32
    %106 = vector.broadcast %cst_66 : f32 to vector<32x256xf32>
    %107 = arith.addf %106, %105 : vector<32x256xf32>
    %108 = arith.mulf %71, %107 : vector<32x256xf32>
    %c0_67 = arith.constant 0 : index
    %c0_68 = arith.constant 0 : index
    %c0_69 = arith.constant 0 : index
    %109 = vector.load %arg5[%c0_67, %c0_68, %c0_69] : memref<2x32x256xf32, #tpu.memory_space<vmem>>, vector<1x32x256xf32>
    %110 = vector.shape_cast %109 : vector<1x32x256xf32> to vector<32x256xf32>
    %111 = vector.shape_cast %108 : vector<32x256xf32> to vector<1x32x256xf32>
    tpu.vector_store %arg5[%c0_67, %c0_68, %c0_69], %111 {strides = array<i32>} : memref<2x32x256xf32, #tpu.memory_space<vmem>>, vector<1x32x256xf32>,
    %c1_70 = arith.constant 1 : index
    %c0_71 = arith.constant 0 : index
    %c0_72 = arith.constant 0 : index
    %112 = vector.load %arg4[%c1_70, %c0_71, %c0_72] : memref<2x32x384xbf16, #tpu.memory_space<vmem>>, vector<1x32x256xbf16>
    %113 = vector.shape_cast %112 : vector<1x32x256xbf16> to vector<32x256xbf16>
    %c0_73 = arith.constant 0 : index
    %c0_74 = arith.constant 0 : index
    %c0_75 = arith.constant 0 : index
    %114 = vector.load %arg1[%c0_73, %c0_74, %c0_75] : memref<9x32x32xbf16, #tpu.memory_space<vmem>>, vector<1x32x32xbf16>
    %115 = vector.shape_cast %114 : vector<1x32x32xbf16> to vector<32x32xbf16>
    %cst_76 = arith.constant dense<0.000000e+00> : vector<32x256xf32>
    %116 = tpu.matmul %115, %113, %cst_76 {dimension_numbers = #tpu.dot_dimension_numbers<[1], [0], [0], [1], [0, 0, 1, 1], [], []>} : vector<32x32xbf16>, vector<32x256xbf16>, vector<32x256xf32> -> vector<32x256xf32>
    %117 = vector.broadcast %1 : vector<1x256xf32> to vector<32x256xf32>
    %118 = arith.mulf %116, %117 : vector<32x256xf32>
    %c1_77 = arith.constant 1 : index
    %c0_78 = arith.constant 0 : index
    %c1_79 = arith.constant 1 : index
    %119 = vector.load %arg4[%c1_77, %c0_78, %c1_79] : memref<2x32x384xbf16, #tpu.memory_space<vmem>>, vector<1x32x256xbf16>
    %120 = vector.shape_cast %119 : vector<1x32x256xbf16> to vector<32x256xbf16>
    %c1_80 = arith.constant 1 : index
    %c0_81 = arith.constant 0 : index
    %c0_82 = arith.constant 0 : index
    %121 = vector.load %arg1[%c1_80, %c0_81, %c0_82] : memref<9x32x32xbf16, #tpu.memory_space<vmem>>, vector<1x32x32xbf16>
    %122 = vector.shape_cast %121 : vector<1x32x32xbf16> to vector<32x32xbf16>
    %cst_83 = arith.constant dense<0.000000e+00> : vector<32x256xf32>
    %123 = tpu.matmul %122, %120, %cst_83 {dimension_numbers = #tpu.dot_dimension_numbers<[1], [0], [0], [1], [0, 0, 1, 1], [], []>} : vector<32x32xbf16>, vector<32x256xbf16>, vector<32x256xf32> -> vector<32x256xf32>
    %124 = arith.addf %118, %123 : vector<32x256xf32>
    %c1_84 = arith.constant 1 : index
    %c0_85 = arith.constant 0 : index
    %c2_86 = arith.constant 2 : index
    %125 = vector.load %arg4[%c1_84, %c0_85, %c2_86] : memref<2x32x384xbf16, #tpu.memory_space<vmem>>, vector<1x32x256xbf16>
    %126 = vector.shape_cast %125 : vector<1x32x256xbf16> to vector<32x256xbf16>
    %c2_87 = arith.constant 2 : index
    %c0_88 = arith.constant 0 : index
    %c0_89 = arith.constant 0 : index
    %127 = vector.load %arg1[%c2_87, %c0_88, %c0_89] : memref<9x32x32xbf16, #tpu.memory_space<vmem>>, vector<1x32x32xbf16>
    %128 = vector.shape_cast %127 : vector<1x32x32xbf16> to vector<32x32xbf16>
    %cst_90 = arith.constant dense<0.000000e+00> : vector<32x256xf32>
    %129 = tpu.matmul %128, %126, %cst_90 {dimension_numbers = #tpu.dot_dimension_numbers<[1], [0], [0], [1], [0, 0, 1, 1], [], []>} : vector<32x32xbf16>, vector<32x256xbf16>, vector<32x256xf32> -> vector<32x256xf32>
    %130 = vector.broadcast %2 : vector<1x256xf32> to vector<32x256xf32>
    %131 = arith.mulf %129, %130 : vector<32x256xf32>
    %132 = arith.addf %124, %131 : vector<32x256xf32>
    %c1_91 = arith.constant 1 : index
    %c0_92 = arith.constant 0 : index
    %c16_93 = arith.constant 16 : index
    %133 = vector.load %arg4[%c1_91, %c0_92, %c16_93] : memref<2x32x384xbf16, #tpu.memory_space<vmem>>, vector<1x32x256xbf16>
    %134 = vector.shape_cast %133 : vector<1x32x256xbf16> to vector<32x256xbf16>
    %c3_94 = arith.constant 3 : index
    %c0_95 = arith.constant 0 : index
    %c0_96 = arith.constant 0 : index
    %135 = vector.load %arg1[%c3_94, %c0_95, %c0_96] : memref<9x32x32xbf16, #tpu.memory_space<vmem>>, vector<1x32x32xbf16>
    %136 = vector.shape_cast %135 : vector<1x32x32xbf16> to vector<32x32xbf16>
    %cst_97 = arith.constant dense<0.000000e+00> : vector<32x256xf32>
    %137 = tpu.matmul %136, %134, %cst_97 {dimension_numbers = #tpu.dot_dimension_numbers<[1], [0], [0], [1], [0, 0, 1, 1], [], []>} : vector<32x32xbf16>, vector<32x256xbf16>, vector<32x256xf32> -> vector<32x256xf32>
    %138 = vector.broadcast %1 : vector<1x256xf32> to vector<32x256xf32>
    %139 = arith.mulf %137, %138 : vector<32x256xf32>
    %140 = arith.addf %132, %139 : vector<32x256xf32>
    %c1_98 = arith.constant 1 : index
    %c0_99 = arith.constant 0 : index
    %c17_100 = arith.constant 17 : index
    %141 = vector.load %arg4[%c1_98, %c0_99, %c17_100] : memref<2x32x384xbf16, #tpu.memory_space<vmem>>, vector<1x32x256xbf16>
    %142 = vector.shape_cast %141 : vector<1x32x256xbf16> to vector<32x256xbf16>
    %c4_101 = arith.constant 4 : index
    %c0_102 = arith.constant 0 : index
    %c0_103 = arith.constant 0 : index
    %143 = vector.load %arg1[%c4_101, %c0_102, %c0_103] : memref<9x32x32xbf16, #tpu.memory_space<vmem>>, vector<1x32x32xbf16>
    %144 = vector.shape_cast %143 : vector<1x32x32xbf16> to vector<32x32xbf16>
    %cst_104 = arith.constant dense<0.000000e+00> : vector<32x256xf32>
    %145 = tpu.matmul %144, %142, %cst_104 {dimension_numbers = #tpu.dot_dimension_numbers<[1], [0], [0], [1], [0, 0, 1, 1], [], []>} : vector<32x32xbf16>, vector<32x256xbf16>, vector<32x256xf32> -> vector<32x256xf32>
    %146 = arith.addf %140, %145 : vector<32x256xf32>
    %c1_105 = arith.constant 1 : index
    %c0_106 = arith.constant 0 : index
    %c18_107 = arith.constant 18 : index
    %147 = vector.load %arg4[%c1_105, %c0_106, %c18_107] : memref<2x32x384xbf16, #tpu.memory_space<vmem>>, vector<1x32x256xbf16>
    %148 = vector.shape_cast %147 : vector<1x32x256xbf16> to vector<32x256xbf16>
    %c5_108 = arith.constant 5 : index
    %c0_109 = arith.constant 0 : index
    %c0_110 = arith.constant 0 : index
    %149 = vector.load %arg1[%c5_108, %c0_109, %c0_110] : memref<9x32x32xbf16, #tpu.memory_space<vmem>>, vector<1x32x32xbf16>
    %150 = vector.shape_cast %149 : vector<1x32x32xbf16> to vector<32x32xbf16>
    %cst_111 = arith.constant dense<0.000000e+00> : vector<32x256xf32>
    %151 = tpu.matmul %150, %148, %cst_111 {dimension_numbers = #tpu.dot_dimension_numbers<[1], [0], [0], [1], [0, 0, 1, 1], [], []>} : vector<32x32xbf16>, vector<32x256xbf16>, vector<32x256xf32> -> vector<32x256xf32>
    %152 = vector.broadcast %2 : vector<1x256xf32> to vector<32x256xf32>
    %153 = arith.mulf %151, %152 : vector<32x256xf32>
    %154 = arith.addf %146, %153 : vector<32x256xf32>
    %c1_112 = arith.constant 1 : index
    %c0_113 = arith.constant 0 : index
    %c32_114 = arith.constant 32 : index
    %155 = vector.load %arg4[%c1_112, %c0_113, %c32_114] : memref<2x32x384xbf16, #tpu.memory_space<vmem>>, vector<1x32x256xbf16>
    %156 = vector.shape_cast %155 : vector<1x32x256xbf16> to vector<32x256xbf16>
    %c6_115 = arith.constant 6 : index
    %c0_116 = arith.constant 0 : index
    %c0_117 = arith.constant 0 : index
    %157 = vector.load %arg1[%c6_115, %c0_116, %c0_117] : memref<9x32x32xbf16, #tpu.memory_space<vmem>>, vector<1x32x32xbf16>
    %158 = vector.shape_cast %157 : vector<1x32x32xbf16> to vector<32x32xbf16>
    %cst_118 = arith.constant dense<0.000000e+00> : vector<32x256xf32>
    %159 = tpu.matmul %158, %156, %cst_118 {dimension_numbers = #tpu.dot_dimension_numbers<[1], [0], [0], [1], [0, 0, 1, 1], [], []>} : vector<32x32xbf16>, vector<32x256xbf16>, vector<32x256xf32> -> vector<32x256xf32>
    %160 = vector.broadcast %1 : vector<1x256xf32> to vector<32x256xf32>
    %161 = arith.mulf %159, %160 : vector<32x256xf32>
    %162 = arith.addf %154, %161 : vector<32x256xf32>
    %c1_119 = arith.constant 1 : index
    %c0_120 = arith.constant 0 : index
    %c33_121 = arith.constant 33 : index
    %163 = vector.load %arg4[%c1_119, %c0_120, %c33_121] : memref<2x32x384xbf16, #tpu.memory_space<vmem>>, vector<1x32x256xbf16>
    %164 = vector.shape_cast %163 : vector<1x32x256xbf16> to vector<32x256xbf16>
    %c7_122 = arith.constant 7 : index
    %c0_123 = arith.constant 0 : index
    %c0_124 = arith.constant 0 : index
    %165 = vector.load %arg1[%c7_122, %c0_123, %c0_124] : memref<9x32x32xbf16, #tpu.memory_space<vmem>>, vector<1x32x32xbf16>
    %166 = vector.shape_cast %165 : vector<1x32x32xbf16> to vector<32x32xbf16>
    %cst_125 = arith.constant dense<0.000000e+00> : vector<32x256xf32>
    %167 = tpu.matmul %166, %164, %cst_125 {dimension_numbers = #tpu.dot_dimension_numbers<[1], [0], [0], [1], [0, 0, 1, 1], [], []>} : vector<32x32xbf16>, vector<32x256xbf16>, vector<32x256xf32> -> vector<32x256xf32>
    %168 = arith.addf %162, %167 : vector<32x256xf32>
    %c1_126 = arith.constant 1 : index
    %c0_127 = arith.constant 0 : index
    %c34_128 = arith.constant 34 : index
    %169 = vector.load %arg4[%c1_126, %c0_127, %c34_128] : memref<2x32x384xbf16, #tpu.memory_space<vmem>>, vector<1x32x256xbf16>
    %170 = vector.shape_cast %169 : vector<1x32x256xbf16> to vector<32x256xbf16>
    %c8_129 = arith.constant 8 : index
    %c0_130 = arith.constant 0 : index
    %c0_131 = arith.constant 0 : index
    %171 = vector.load %arg1[%c8_129, %c0_130, %c0_131] : memref<9x32x32xbf16, #tpu.memory_space<vmem>>, vector<1x32x32xbf16>
    %172 = vector.shape_cast %171 : vector<1x32x32xbf16> to vector<32x32xbf16>
    %cst_132 = arith.constant dense<0.000000e+00> : vector<32x256xf32>
    %173 = tpu.matmul %172, %170, %cst_132 {dimension_numbers = #tpu.dot_dimension_numbers<[1], [0], [0], [1], [0, 0, 1, 1], [], []>} : vector<32x32xbf16>, vector<32x256xbf16>, vector<32x256xf32> -> vector<32x256xf32>
    %174 = vector.broadcast %2 : vector<1x256xf32> to vector<32x256xf32>
    %175 = arith.mulf %173, %174 : vector<32x256xf32>
    %176 = arith.addf %168, %175 : vector<32x256xf32>
    %177 = vector.broadcast %0 : vector<32x1xf32> to vector<32x256xf32>
    %178 = arith.addf %176, %177 : vector<32x256xf32>
    %cst_133 = arith.constant 5.000000e-01 : f32
    %179 = vector.broadcast %cst_133 : f32 to vector<32x256xf32>
    %180 = arith.mulf %179, %178 : vector<32x256xf32>
    %cst_134 = arith.constant 0.707106769 : f32
    %181 = vector.broadcast %cst_134 : f32 to vector<32x256xf32>
    %182 = arith.mulf %178, %181 : vector<32x256xf32>
    %183 = math.absf %182 : vector<32x256xf32>
    %cst_135 = arith.constant 0.327591091 : f32
    %184 = vector.broadcast %cst_135 : f32 to vector<32x256xf32>
    %185 = arith.mulf %184, %183 : vector<32x256xf32>
    %cst_136 = arith.constant 1.000000e+00 : f32
    %186 = vector.broadcast %cst_136 : f32 to vector<32x256xf32>
    %187 = arith.addf %186, %185 : vector<32x256xf32>
    %188 = tpu.reciprocal %187 {approx = true} : vector<32x256xf32> -> vector<32x256xf32>
    %cst_137 = arith.constant 1.06140542 : f32
    %189 = vector.broadcast %cst_137 : f32 to vector<32x256xf32>
    %190 = arith.mulf %189, %188 : vector<32x256xf32>
    %cst_138 = arith.constant -1.45315206 : f32
    %191 = vector.broadcast %cst_138 : f32 to vector<32x256xf32>
    %192 = arith.addf %190, %191 : vector<32x256xf32>
    %193 = arith.mulf %192, %188 : vector<32x256xf32>
    %cst_139 = arith.constant 1.42141378 : f32
    %194 = vector.broadcast %cst_139 : f32 to vector<32x256xf32>
    %195 = arith.addf %193, %194 : vector<32x256xf32>
    %196 = arith.mulf %195, %188 : vector<32x256xf32>
    %cst_140 = arith.constant -0.284496725 : f32
    %197 = vector.broadcast %cst_140 : f32 to vector<32x256xf32>
    %198 = arith.addf %196, %197 : vector<32x256xf32>
    %199 = arith.mulf %198, %188 : vector<32x256xf32>
    %cst_141 = arith.constant 0.254829586 : f32
    %200 = vector.broadcast %cst_141 : f32 to vector<32x256xf32>
    %201 = arith.addf %199, %200 : vector<32x256xf32>
    %202 = arith.mulf %201, %188 : vector<32x256xf32>
    %cst_142 = arith.constant 0.000000e+00 : f32
    %203 = vector.broadcast %cst_142 : f32 to vector<32x256xf32>
    %204 = arith.subf %203, %183 : vector<32x256xf32>
    %205 = arith.mulf %204, %183 : vector<32x256xf32>
    %206 = math.exp %205 : vector<32x256xf32>
    %207 = arith.mulf %202, %206 : vector<32x256xf32>
    %cst_143 = arith.constant 1.000000e+00 : f32
    %208 = vector.broadcast %cst_143 : f32 to vector<32x256xf32>
    %209 = arith.subf %208, %207 : vector<32x256xf32>
    %cst_144 = arith.constant 0.000000e+00 : f32
    %210 = vector.broadcast %cst_144 : f32 to vector<32x256xf32>
    %211 = arith.cmpf oge, %182, %210 : vector<32x256xf32>
    %cst_145 = arith.constant 0.000000e+00 : f32
    %212 = vector.broadcast %cst_145 : f32 to vector<32x256xf32>
    %213 = arith.subf %212, %209 : vector<32x256xf32>
    %214 = arith.select %211, %209, %213 : vector<32x256xi1>, vector<32x256xf32>
    %cst_146 = arith.constant 1.000000e+00 : f32
    %215 = vector.broadcast %cst_146 : f32 to vector<32x256xf32>
    %216 = arith.addf %215, %214 : vector<32x256xf32>
    %217 = arith.mulf %180, %216 : vector<32x256xf32>
    %c1_147 = arith.constant 1 : index
    %c0_148 = arith.constant 0 : index
    %c0_149 = arith.constant 0 : index
    %218 = vector.load %arg5[%c1_147, %c0_148, %c0_149] : memref<2x32x256xf32, #tpu.memory_space<vmem>>, vector<1x32x256xf32>
    %219 = vector.shape_cast %218 : vector<1x32x256xf32> to vector<32x256xf32>
    %220 = vector.shape_cast %217 : vector<32x256xf32> to vector<1x32x256xf32>
    tpu.vector_store %arg5[%c1_147, %c0_148, %c0_149], %220 {strides = array<i32>} : memref<2x32x256xf32, #tpu.memory_space<vmem>>, vector<1x32x256xf32>,
    return
  }
  func.func @transform_0(%arg0: i32) -> (i32, i32, i32) {
    %c0_i32 = arith.constant 0 : i32
    %c0_i32_0 = arith.constant 0 : i32
    %c0_i32_1 = arith.constant 0 : i32
    %c0_i32_2 = arith.constant 0 : i32
    return %c0_i32, %c0_i32_0, %c0_i32_1 : i32, i32, i32
  }
  func.func @transform_1(%arg0: i32) -> (i32, i32) {
    %c0_i32 = arith.constant 0 : i32
    %c0_i32_0 = arith.constant 0 : i32
    %c0_i32_1 = arith.constant 0 : i32
    return %c0_i32, %c0_i32_0 : i32, i32
  }
  func.func @transform_2(%arg0: i32) -> (i32, i32) {
    %c0_i32 = arith.constant 0 : i32
    %c0_i32_0 = arith.constant 0 : i32
    %c0_i32_1 = arith.constant 0 : i32
    return %c0_i32, %c0_i32_0 : i32, i32
  }
  func.func @transform_3(%arg0: i32) -> (i32, i32, i32) {
    %c0_i32 = arith.constant 0 : i32
    %c0_i32_0 = arith.constant 0 : i32
    %c0_i32_1 = arith.constant 0 : i32
    return %arg0, %c0_i32, %c0_i32_0 : i32, i32, i32
  }
  func.func @transform_4(%arg0: i32) -> (i32, i32, i32) {
    %c0_i32 = arith.constant 0 : i32
    %c0_i32_0 = arith.constant 0 : i32
    %c0_i32_1 = arith.constant 0 : i32
    return %arg0, %c0_i32, %c0_i32_0 : i32, i32, i32
  }
}

</mosaic_0001>

<llo_original>
// kernel: _lambda_.1
$region0: #{_lambda_.1}
  #allocation0 [shape = 'u32[]', space=smem, size = 0x4, offset = 0x4, fixed_abs, tag = 'smem constant byte address 0x4 - core index']
  #allocation1 [shape = 'u32[144,128]{1,0:T(1,128)}', space=vmem, size = 0x12000, scoped, tag = 'internal scratch']
  %s0 = inlined_call_operand.vmem [shape: bf16[9,32,32], index: 0, kind: input, shape index: {}]
  %s1 = inlined_call_operand.vmem [shape: f32[32,1], index: 1, kind: input, shape index: {}]
  %s2 = inlined_call_operand.vmem [shape: f32[2,256], index: 2, kind: input, shape index: {}]
  %s3 = inlined_call_operand.vmem [shape: bf16[2,32,384], index: 3, kind: input, shape index: {}]
  %s4 = inlined_call_operand.vmem [shape: f32[2,32,256], index: 4, kind: output, shape index: {}]
  %s5 = sld [smem:[#allocation0]]
  $region26: #{_lambda_.1} parent=0
    _
  %s7 = ssub.s32 1, %s5
  %s8 = scalar_select 0, %s7, %s5
  // Predicated region
  $region2: #{_lambda_.1} parent=0 // pred_check
    _
  $region3: #{_lambda_.1} parent=0 // pred_check_branch
    %10 = sbr.rel (0) target = $region5
  $region4: #{_lambda_.1} parent=0 // pred_region
    _
  $region5: #{_lambda_.1} parent=0 // pred_fallthru
    _
  // Predicated region
  $region6: #{_lambda_.1} parent=0 // pred_check
    _
  $region7: #{_lambda_.1} parent=0 // pred_check_branch
    %12 = sbr.rel (0) target = $region9
  $region8: #{_lambda_.1} parent=0 // pred_region
    _
  $region9: #{_lambda_.1} parent=0 // pred_fallthru
    _
  // Predicated region
  $region10: #{_lambda_.1} parent=0 // pred_check
    _
  $region11: #{_lambda_.1} parent=0 // pred_check_branch
    %14 = sbr.rel (0) target = $region13
  $region12: #{_lambda_.1} parent=0 // pred_region
    _
  $region13: #{_lambda_.1} parent=0 // pred_fallthru
    _
  // Predicated region
  $region14: #{_lambda_.1} parent=0 // pred_check
    _
  $region15: #{_lambda_.1} parent=0 // pred_check_branch
    %16 = sbr.rel (0) target = $region17
  $region16: #{_lambda_.1} parent=0 // pred_region
    _
  $region17: #{_lambda_.1} parent=0 // pred_fallthru
    _
  %v18 = vld [vmem:[%s1] sm:$0xff]
  %v19 = vld [vmem:[%s1 + $0x8] sm:$0xff]
  %v20 = vld [vmem:[%s1 + $0x10] sm:$0xff]
  %v21 = vld [vmem:[%s1 + $0x18] sm:$0xff]
  %v22 = vld [vmem:[%s2] ss:$2 sm:$0x3]
  %s23 = scalar_lea.vmem %s2, 1
  %v24 = vld [vmem:[%s23] ss:$2 sm:$0x3]
  %v25 = vld [vmem:[%s3] sm:$0xff]
  %v26 = vld [vmem:[%s3 + $0xc] sm:$0xff]
  %v27 = vld [vmem:[%s3 + $0x18] sm:$0xff]
  %v28 = vld [vmem:[%s3 + $0x24] sm:$0xff]
  %v29 = vld [vmem:[%s0] sm:$0xf]
  %v30 = vld [vmem:[%s0 + $0x4] sm:$0xf]
  %v31 = vld [vmem:[%s0 + $0x8] sm:$0xf]
  %v32 = vld [vmem:[%s0 + $0xc] sm:$0xf]
  %v37 = vunpack.c.l.b16 %v29
  %v38 = vunpack.c.l.b16 %v30
  %v39 = vunpack.c.l.b16 %v31
  %v40 = vunpack.c.l.b16 %v32
  %v41 = vpack.c.b16 %v38, %v37
  %v42 = vpack.c.b16 %v40, %v39
  %v47 = vunpack.c.l.b16 %v25
  %v48 = vunpack.c.h.b16 %v25
  %v49 = vunpack.c.l.b16 %v26
  %v50 = vunpack.c.h.b16 %v26
  %v51 = vunpack.c.l.b16 %v27
  %v52 = vunpack.c.h.b16 %v27
  %v53 = vunpack.c.l.b16 %v28
  %v54 = vunpack.c.h.b16 %v28
  %v55 = vpack.c.b16 %v49, %v47
  %v56 = vpack.c.b16 %v50, %v48
  %v57 = vpack.c.b16 %v53, %v51
  %v58 = vpack.c.b16 %v54, %v52
  %vm63 = vcmask 261120
  %v65 = vsel %vm63, %v41, 0
  %v68 = vsel %vm63, %v42, 0
  %70 = vmatprep.subr.bf16.mxu0 %v56
  %71 = vmatpush1.bf16.msra.mxu0 %v55
  %72 = vmatprep.subr.bf16.mxu0 %v58
  %73 = vmatpush1.bf16.msra.mxu0 %v57
  %74 = vmatprep.subr.bf16.mxu0 0
  %75 = vmatpush1.bf16.msra.mxu0 0
  %76 = vmatprep.subr.bf16.mxu0 0
  %77 = vmatpush1.bf16.msra.mxu0 0
  %78 = vmatprep.subr.bf16.mxu0 0
  %79 = vmatpush1.bf16.msra.mxu0 0
  %80 = vmatprep.subr.bf16.mxu0 0
  %81 = vmatpush1.bf16.msra.mxu0 0
  %82 = vmatprep.subr.bf16.mxu0 0
  %83 = vmatpush1.bf16.msra.mxu0 0
  %84 = vmatprep.subr.bf16.mxu0 0
  %85 = vmatpush1.bf16.msra.mxu0 0
  %86 = vmatprep.subr.bf16.mxu0 0
  %87 = vmatpush1.bf16.msra.mxu0 0
  %88 = vmatprep.subr.bf16.mxu0 0
  %89 = vmatpush1.bf16.msra.mxu0 0
  %90 = vmatprep.subr.bf16.mxu0 0
  %91 = vmatpush1.bf16.msra.mxu0 0
  %92 = vmatprep.subr.bf16.mxu0 0
  %93 = vmatpush1.bf16.msra.mxu0 0
  %94 = vmatprep.subr.bf16.mxu0 0
  %95 = vmatpush1.bf16.msra.mxu0 0
  %96 = vmatprep.subr.bf16.mxu0 0
  %97 = vmatpush1.bf16.msra.mxu0 0
  %98 = vmatprep.subr.bf16.mxu0 0
  %99 = vmatpush1.bf16.msra.mxu0 0
  %100 = vmatprep.subr.bf16.mxu0 0
  %101 = vmatpush1.bf16.msra.mxu0 0
  %102 = vmatprep.mubr.bf16.mxu0 0
  %103 = vmatmul.mubr.bf16.gmra.mrb[0].mxu0 %v65
  %v104 = vpop.f32.mrb[0].mxu0
  %v105 = vadd.f32 0.0, %v104
  %v106 = vpop.f32.mrb[0].mxu0
  %v107 = vadd.f32 0.0, %v106
  %v108 = vpop.f32.mrb[0].mxu0
  %v109 = vadd.f32 0.0, %v108
  %v110 = vpop.f32.mrb[0].mxu0
  %v111 = vadd.f32 0.0, %v110
  %112 = vmatprep.mubr.bf16.mxu0 0
  %113 = vmatmul.mubr.bf16.gmra.mrb[0].mxu0 %v68
  %v114 = vpop.f32.mrb[0].mxu0
  %v115 = vadd.f32 0.0, %v114
  %v116 = vpop.f32.mrb[0].mxu0
  %v117 = vadd.f32 0.0, %v116
  %v118 = vpop.f32.mrb[0].mxu0
  %v119 = vadd.f32 0.0, %v118
  %v120 = vpop.f32.mrb[0].mxu0
  %v121 = vadd.f32 0.0, %v120
  %122 = vdwg.mxu0
  %v124 = vlaneseq
  %v125 = vshrl.u32 %v124, 7
  %v126 = vsub.s32 0, %v125
  %v127 = vrot.slane %v22, %v126
  %v128 = vlaneseq
  %v129 = vshrl.u32 %v128, 7
  %v130 = vsub.s32 1, %v129
  %v131 = vrot.slane %v22, %v130
  %v134 = vmul.f32 %v105, %v127
  %v135 = vmul.f32 %v107, %v131
  %v136 = vmul.f32 %v109, %v127
  %v137 = vmul.f32 %v111, %v131
  %v138 = vmul.f32 %v115, %v127
  %v139 = vmul.f32 %v117, %v131
  %v140 = vmul.f32 %v119, %v127
  %v141 = vmul.f32 %v121, %v131
  %v142 = vld [vmem:[%s3] sm:$0xff]
  %v143 = vld [vmem:[%s3 + $0x8] sm:$0xf]
  %v144 = vld [vmem:[%s3 + $0xc] sm:$0xff]
  %v145 = vld [vmem:[%s3 + $0x14] sm:$0xf]
  %v146 = vld [vmem:[%s3 + $0x18] sm:$0xff]
  %v147 = vld [vmem:[%s3 + $0x20] sm:$0xf]
  %v148 = vld [vmem:[%s3 + $0x24] sm:$0xff]
  %v149 = vld [vmem:[%s3 + $0x2c] sm:$0xf]
  %s150 = scalar_lea.vmem %s0, 16
  %v151 = vld [vmem:[%s150] sm:$0xf]
  %v152 = vld [vmem:[%s150 + $0x4] sm:$0xf]
  %v153 = vld [vmem:[%s150 + $0x8] sm:$0xf]
  %v154 = vld [vmem:[%s150 + $0xc] sm:$0xf]
  %v159 = vunpack.c.l.b16 %v151
  %v160 = vunpack.c.l.b16 %v152
  %v161 = vunpack.c.l.b16 %v153
  %v162 = vunpack.c.l.b16 %v154
  %v163 = vpack.c.b16 %v160, %v159
  %v164 = vpack.c.b16 %v162, %v161
  %v173 = vunpack.c.l.b16 %v142
  %v174 = vunpack.c.h.b16 %v142
  %v175 = vunpack.c.l.b16 %v143
  %v176 = vunpack.c.l.b16 %v144
  %v177 = vunpack.c.h.b16 %v144
  %v178 = vunpack.c.l.b16 %v145
  %v179 = vunpack.c.l.b16 %v146
  %v180 = vunpack.c.h.b16 %v146
  %v181 = vunpack.c.l.b16 %v147
  %v182 = vunpack.c.l.b16 %v148
  %v183 = vunpack.c.h.b16 %v148
  %v184 = vunpack.c.l.b16 %v149
  %v185 = vpack.c.b16 %v176, %v173
  %v186 = vpack.c.b16 %v177, %v174
  %v187 = vpack.c.b16 %v178, %v175
  %v188 = vpack.c.b16 %v182, %v179
  %v189 = vpack.c.b16 %v183, %v180
  %v190 = vpack.c.b16 %v184, %v181
  %191 = vrot.lane.b32.xlu0 %v185, 127
  %v192 = vpop.permute.xlu0 %191
  %193 = vrot.lane.b32.xlu0 %v186, 127
  %v194 = vpop.permute.xlu0 %193
  %195 = vrot.lane.b32.xlu0 %v187, 127
  %v196 = vpop.permute.xlu0 %195
  %197 = vrot.lane.b32.xlu0 %v188, 127
  %v198 = vpop.permute.xlu0 %197
  %199 = vrot.lane.b32.xlu0 %v189, 127
  %v200 = vpop.permute.xlu0 %199
  %201 = vrot.lane.b32.xlu0 %v190, 127
  %v202 = vpop.permute.xlu0 %201
  %vm203 = vcmask 1039360
  %v204 = vsel %vm203, %v192, %v194
  %v205 = vsel %vm203, %v194, %v196
  %v206 = vsel %vm203, %v198, %v200
  %v207 = vsel %vm203, %v200, %v202
  %v213 = vsel %vm63, %v163, 0
  %v216 = vsel %vm63, %v164, 0
  %218 = vmatprep.subr.bf16.mxu0 %v205
  %219 = vmatpush1.bf16.msra.mxu0 %v204
  %220 = vmatprep.subr.bf16.mxu0 %v207
  %221 = vmatpush1.bf16.msra.mxu0 %v206
  %222 = vmatprep.subr.bf16.mxu0 0
  %223 = vmatpush1.bf16.msra.mxu0 0
  %224 = vmatprep.subr.bf16.mxu0 0
  %225 = vmatpush1.bf16.msra.mxu0 0
  %226 = vmatprep.subr.bf16.mxu0 0
  %227 = vmatpush1.bf16.msra.mxu0 0
  %228 = vmatprep.subr.bf16.mxu0 0
  %229 = vmatpush1.bf16.msra.mxu0 0
  %230 = vmatprep.subr.bf16.mxu0 0
  %231 = vmatpush1.bf16.msra.mxu0 0
  %232 = vmatprep.subr.bf16.mxu0 0
  %233 = vmatpush1.bf16.msra.mxu0 0
  %234 = vmatprep.subr.bf16.mxu0 0
  %235 = vmatpush1.bf16.msra.mxu0 0
  %236 = vmatprep.subr.bf16.mxu0 0
  %237 = vmatpush1.bf16.msra.mxu0 0
  %238 = vmatprep.subr.bf16.mxu0 0
  %239 = vmatpush1.bf16.msra.mxu0 0
  %240 = vmatprep.subr.bf16.mxu0 0
  %241 = vmatpush1.bf16.msra.mxu0 0
  %242 = vmatprep.subr.bf16.mxu0 0
  %243 = vmatpush1.bf16.msra.mxu0 0
  %244 = vmatprep.subr.bf16.mxu0 0
  %245 = vmatpush1.bf16.msra.mxu0 0
  %246 = vmatprep.subr.bf16.mxu0 0
  %247 = vmatpush1.bf16.msra.mxu0 0
  %248 = vmatprep.subr.bf16.mxu0 0
  %249 = vmatpush1.bf16.msra.mxu0 0
  %250 = vmatprep.mubr.bf16.mxu0 0
  %251 = vmatmul.mubr.bf16.gmra.mrb[0].mxu0 %v213
  %v252 = vpop.f32.mrb[0].mxu0
  %v253 = vadd.f32 0.0, %v252
  %v254 = vpop.f32.mrb[0].mxu0
  %v255 = vadd.f32 0.0, %v254
  %v256 = vpop.f32.mrb[0].mxu0
  %v257 = vadd.f32 0.0, %v256
  %v258 = vpop.f32.mrb[0].mxu0
  %v259 = vadd.f32 0.0, %v258
  %260 = vmatprep.mubr.bf16.mxu0 0
  %261 = vmatmul.mubr.bf16.gmra.mrb[0].mxu0 %v216
  %v262 = vpop.f32.mrb[0].mxu0
  %v263 = vadd.f32 0.0, %v262
  %v264 = vpop.f32.mrb[0].mxu0
  %v265 = vadd.f32 0.0, %v264
  %v266 = vpop.f32.mrb[0].mxu0
  %v267 = vadd.f32 0.0, %v266
  %v268 = vpop.f32.mrb[0].mxu0
  %v269 = vadd.f32 0.0, %v268
  %270 = vdwg.mxu0
  %v271 = vadd.f32 %v134, %v253
  %v272 = vadd.f32 %v135, %v255
  %v273 = vadd.f32 %v136, %v257
  %v274 = vadd.f32 %v137, %v259
  %v275 = vadd.f32 %v138, %v263
  %v276 = vadd.f32 %v139, %v265
  %v277 = vadd.f32 %v140, %v267
  %v278 = vadd.f32 %v141, %v269
  %s279 = scalar_lea.vmem %s0, 32
  %v280 = vld [vmem:[%s279] sm:$0xf]
  %v281 = vld [vmem:[%s279 + $0x4] sm:$0xf]
  %v282 = vld [vmem:[%s279 + $0x8] sm:$0xf]
  %v283 = vld [vmem:[%s279 + $0xc] sm:$0xf]
  %v288 = vunpack.c.l.b16 %v280
  %v289 = vunpack.c.l.b16 %v281
  %v290 = vunpack.c.l.b16 %v282
  %v291 = vunpack.c.l.b16 %v283
  %v292 = vpack.c.b16 %v289, %v288
  %v293 = vpack.c.b16 %v291, %v290
  %294 = vrot.lane.b32.xlu0 %v185, 126
  %v295 = vpop.permute.xlu0 %294
  %296 = vrot.lane.b32.xlu0 %v186, 126
  %v297 = vpop.permute.xlu0 %296
  %298 = vrot.lane.b32.xlu0 %v187, 126
  %v299 = vpop.permute.xlu0 %298
  %300 = vrot.lane.b32.xlu0 %v188, 126
  %v301 = vpop.permute.xlu0 %300
  %302 = vrot.lane.b32.xlu0 %v189, 126
  %v303 = vpop.permute.xlu0 %302
  %304 = vrot.lane.b32.xlu0 %v190, 126
  %v305 = vpop.permute.xlu0 %304
  %vm306 = vcmask 1031168
  %v307 = vsel %vm306, %v295, %v297
  %v308 = vsel %vm306, %v297, %v299
  %v309 = vsel %vm306, %v301, %v303
  %v310 = vsel %vm306, %v303, %v305
  %v316 = vsel %vm63, %v292, 0
  %v319 = vsel %vm63, %v293, 0
  %321 = vmatprep.subr.bf16.mxu0 %v308
  %322 = vmatpush1.bf16.msra.mxu0 %v307
  %323 = vmatprep.subr.bf16.mxu0 %v310
  %324 = vmatpush1.bf16.msra.mxu0 %v309
  %325 = vmatprep.subr.bf16.mxu0 0
  %326 = vmatpush1.bf16.msra.mxu0 0
  %327 = vmatprep.subr.bf16.mxu0 0
  %328 = vmatpush1.bf16.msra.mxu0 0
  %329 = vmatprep.subr.bf16.mxu0 0
  %330 = vmatpush1.bf16.msra.mxu0 0
  %331 = vmatprep.subr.bf16.mxu0 0
  %332 = vmatpush1.bf16.msra.mxu0 0
  %333 = vmatprep.subr.bf16.mxu0 0
  %334 = vmatpush1.bf16.msra.mxu0 0
  %335 = vmatprep.subr.bf16.mxu0 0
  %336 = vmatpush1.bf16.msra.mxu0 0
  %337 = vmatprep.subr.bf16.mxu0 0
  %338 = vmatpush1.bf16.msra.mxu0 0
  %339 = vmatprep.subr.bf16.mxu0 0
  %340 = vmatpush1.bf16.msra.mxu0 0
  %341 = vmatprep.subr.bf16.mxu0 0
  %342 = vmatpush1.bf16.msra.mxu0 0
  %343 = vmatprep.subr.bf16.mxu0 0
  %344 = vmatpush1.bf16.msra.mxu0 0
  %345 = vmatprep.subr.bf16.mxu0 0
  %346 = vmatpush1.bf16.msra.mxu0 0
  %347 = vmatprep.subr.bf16.mxu0 0
  %348 = vmatpush1.bf16.msra.mxu0 0
  %349 = vmatprep.subr.bf16.mxu0 0
  %350 = vmatpush1.bf16.msra.mxu0 0
  %351 = vmatprep.subr.bf16.mxu0 0
  %352 = vmatpush1.bf16.msra.mxu0 0
  %353 = vmatprep.mubr.bf16.mxu0 0
  %354 = vmatmul.mubr.bf16.gmra.mrb[0].mxu0 %v316
  %v355 = vpop.f32.mrb[0].mxu0
  %v356 = vadd.f32 0.0, %v355
  %v357 = vpop.f32.mrb[0].mxu0
  %v358 = vadd.f32 0.0, %v357
  %v359 = vpop.f32.mrb[0].mxu0
  %v360 = vadd.f32 0.0, %v359
  %v361 = vpop.f32.mrb[0].mxu0
  %v362 = vadd.f32 0.0, %v361
  %363 = vmatprep.mubr.bf16.mxu0 0
  %364 = vmatmul.mubr.bf16.gmra.mrb[0].mxu0 %v319
  %v365 = vpop.f32.mrb[0].mxu0
  %v366 = vadd.f32 0.0, %v365
  %v367 = vpop.f32.mrb[0].mxu0
  %v368 = vadd.f32 0.0, %v367
  %v369 = vpop.f32.mrb[0].mxu0
  %v370 = vadd.f32 0.0, %v369
  %v371 = vpop.f32.mrb[0].mxu0
  %v372 = vadd.f32 0.0, %v371
  %373 = vdwg.mxu0
  %v375 = vlaneseq
  %v376 = vshrl.u32 %v375, 7
  %v377 = vsub.s32 0, %v376
  %v378 = vrot.slane %v24, %v377
  %v379 = vlaneseq
  %v380 = vshrl.u32 %v379, 7
  %v381 = vsub.s32 1, %v380
  %v382 = vrot.slane %v24, %v381
  %v385 = vmul.f32 %v356, %v378
  %v386 = vmul.f32 %v358, %v382
  %v387 = vmul.f32 %v360, %v378
  %v388 = vmul.f32 %v362, %v382
  %v389 = vmul.f32 %v366, %v378
  %v390 = vmul.f32 %v368, %v382
  %v391 = vmul.f32 %v370, %v378
  %v392 = vmul.f32 %v372, %v382
  %v393 = vadd.f32 %v271, %v385
  %v394 = vadd.f32 %v272, %v386
  %v395 = vadd.f32 %v273, %v387
  %v396 = vadd.f32 %v274, %v388
  %v397 = vadd.f32 %v275, %v389
  %v398 = vadd.f32 %v276, %v390
  %v399 = vadd.f32 %v277, %v391
  %v400 = vadd.f32 %v278, %v392
  %s401 = scalar_lea.vmem %s0, 48
  %v402 = vld [vmem:[%s401] sm:$0xf]
  %v403 = vld [vmem:[%s401 + $0x4] sm:$0xf]
  %v404 = vld [vmem:[%s401 + $0x8] sm:$0xf]
  %v405 = vld [vmem:[%s401 + $0xc] sm:$0xf]
  %v410 = vunpack.c.l.b16 %v402
  %v411 = vunpack.c.l.b16 %v403
  %v412 = vunpack.c.l.b16 %v404
  %v413 = vunpack.c.l.b16 %v405
  %v414 = vpack.c.b16 %v411, %v410
  %v415 = vpack.c.b16 %v413, %v412
  %416 = vrot.lane.b32.xlu0 %v185, 112
  %v417 = vpop.permute.xlu0 %416
  %418 = vrot.lane.b32.xlu0 %v186, 112
  %v419 = vpop.permute.xlu0 %418
  %420 = vrot.lane.b32.xlu0 %v187, 112
  %v421 = vpop.permute.xlu0 %420
  %422 = vrot.lane.b32.xlu0 %v188, 112
  %v423 = vpop.permute.xlu0 %422
  %424 = vrot.lane.b32.xlu0 %v189, 112
  %v425 = vpop.permute.xlu0 %424
  %426 = vrot.lane.b32.xlu0 %v190, 112
  %v427 = vpop.permute.xlu0 %426
  %vm428 = vcmask 916480
  %v429 = vsel %vm428, %v417, %v419
  %v430 = vsel %vm428, %v419, %v421
  %v431 = vsel %vm428, %v423, %v425
  %v432 = vsel %vm428, %v425, %v427
  %v438 = vsel %vm63, %v414, 0
  %v441 = vsel %vm63, %v415, 0
  %443 = vmatprep.subr.bf16.mxu0 %v430
  %444 = vmatpush1.bf16.msra.mxu0 %v429
  %445 = vmatprep.subr.bf16.mxu0 %v432
  %446 = vmatpush1.bf16.msra.mxu0 %v431
  %447 = vmatprep.subr.bf16.mxu0 0
  %448 = vmatpush1.bf16.msra.mxu0 0
  %449 = vmatprep.subr.bf16.mxu0 0
  %450 = vmatpush1.bf16.msra.mxu0 0
  %451 = vmatprep.subr.bf16.mxu0 0
  %452 = vmatpush1.bf16.msra.mxu0 0
  %453 = vmatprep.subr.bf16.mxu0 0
  %454 = vmatpush1.bf16.msra.mxu0 0
  %455 = vmatprep.subr.bf16.mxu0 0
  %456 = vmatpush1.bf16.msra.mxu0 0
  %457 = vmatprep.subr.bf16.mxu0 0
  %458 = vmatpush1.bf16.msra.mxu0 0
  %459 = vmatprep.subr.bf16.mxu0 0
  %460 = vmatpush1.bf16.msra.mxu0 0
  %461 = vmatprep.subr.bf16.mxu0 0
  %462 = vmatpush1.bf16.msra.mxu0 0
  %463 = vmatprep.subr.bf16.mxu0 0
  %464 = vmatpush1.bf16.msra.mxu0 0
  %465 = vmatprep.subr.bf16.mxu0 0
  %466 = vmatpush1.bf16.msra.mxu0 0
  %467 = vmatprep.subr.bf16.mxu0 0
  %468 = vmatpush1.bf16.msra.mxu0 0
  %469 = vmatprep.subr.bf16.mxu0 0
  %470 = vmatpush1.bf16.msra.mxu0 0
  %471 = vmatprep.subr.bf16.mxu0 0
  %472 = vmatpush1.bf16.msra.mxu0 0
  %473 = vmatprep.subr.bf16.mxu0 0
  %474 = vmatpush1.bf16.msra.mxu0 0
  %475 = vmatprep.mubr.bf16.mxu0 0
  %476 = vmatmul.mubr.bf16.gmra.mrb[0].mxu0 %v438
  %v477 = vpop.f32.mrb[0].mxu0
  %v478 = vadd.f32 0.0, %v477
  %v479 = vpop.f32.mrb[0].mxu0
  %v480 = vadd.f32 0.0, %v479
  %v481 = vpop.f32.mrb[0].mxu0
  %v482 = vadd.f32 0.0, %v481
  %v483 = vpop.f32.mrb[0].mxu0
  %v484 = vadd.f32 0.0, %v483
  %485 = vmatprep.mubr.bf16.mxu0 0
  %486 = vmatmul.mubr.bf16.gmra.mrb[0].mxu0 %v441
  %v487 = vpop.f32.mrb[0].mxu0
  %v488 = vadd.f32 0.0, %v487
  %v489 = vpop.f32.mrb[0].mxu0
  %v490 = vadd.f32 0.0, %v489
  %v491 = vpop.f32.mrb[0].mxu0
  %v492 = vadd.f32 0.0, %v491
  %v493 = vpop.f32.mrb[0].mxu0
  %v494 = vadd.f32 0.0, %v493
  %495 = vdwg.mxu0
  %v496 = vmul.f32 %v478, %v127
  %v497 = vmul.f32 %v480, %v131
  %v498 = vmul.f32 %v482, %v127
  %v499 = vmul.f32 %v484, %v131
  %v500 = vmul.f32 %v488, %v127
  %v501 = vmul.f32 %v490, %v131
  %v502 = vmul.f32 %v492, %v127
  %v503 = vmul.f32 %v494, %v131
  %v504 = vadd.f32 %v393, %v496
  %v505 = vadd.f32 %v394, %v497
  %v506 = vadd.f32 %v395, %v498
  %v507 = vadd.f32 %v396, %v499
  %v508 = vadd.f32 %v397, %v500
  %v509 = vadd.f32 %v398, %v501
  %v510 = vadd.f32 %v399, %v502
  %v511 = vadd.f32 %v400, %v503
  %s512 = scalar_lea.vmem %s0, 64
  %v513 = vld [vmem:[%s512] sm:$0xf]
  %v514 = vld [vmem:[%s512 + $0x4] sm:$0xf]
  %v515 = vld [vmem:[%s512 + $0x8] sm:$0xf]
  %v516 = vld [vmem:[%s512 + $0xc] sm:$0xf]
  %v521 = vunpack.c.l.b16 %v513
  %v522 = vunpack.c.l.b16 %v514
  %v523 = vunpack.c.l.b16 %v515
  %v524 = vunpack.c.l.b16 %v516
  %v525 = vpack.c.b16 %v522, %v521
  %v526 = vpack.c.b16 %v524, %v523
  %527 = vrot.lane.b32.xlu0 %v185, 111
  %v528 = vpop.permute.xlu0 %527
  %529 = vrot.lane.b32.xlu0 %v186, 111
  %v530 = vpop.permute.xlu0 %529
  %531 = vrot.lane.b32.xlu0 %v187, 111
  %v532 = vpop.permute.xlu0 %531
  %533 = vrot.lane.b32.xlu0 %v188, 111
  %v534 = vpop.permute.xlu0 %533
  %535 = vrot.lane.b32.xlu0 %v189, 111
  %v536 = vpop.permute.xlu0 %535
  %537 = vrot.lane.b32.xlu0 %v190, 111
  %v538 = vpop.permute.xlu0 %537
  %vm539 = vcmask 908288
  %v540 = vsel %vm539, %v528, %v530
  %v541 = vsel %vm539, %v530, %v532
  %v542 = vsel %vm539, %v534, %v536
  %v543 = vsel %vm539, %v536, %v538
  %v549 = vsel %vm63, %v525, 0
  %v552 = vsel %vm63, %v526, 0
  %554 = vmatprep.subr.bf16.mxu0 %v541
  %555 = vmatpush1.bf16.msra.mxu0 %v540
  %556 = vmatprep.subr.bf16.mxu0 %v543
  %557 = vmatpush1.bf16.msra.mxu0 %v542
  %558 = vmatprep.subr.bf16.mxu0 0
  %559 = vmatpush1.bf16.msra.mxu0 0
  %560 = vmatprep.subr.bf16.mxu0 0
  %561 = vmatpush1.bf16.msra.mxu0 0
  %562 = vmatprep.subr.bf16.mxu0 0
  %563 = vmatpush1.bf16.msra.mxu0 0
  %564 = vmatprep.subr.bf16.mxu0 0
  %565 = vmatpush1.bf16.msra.mxu0 0
  %566 = vmatprep.subr.bf16.mxu0 0
  %567 = vmatpush1.bf16.msra.mxu0 0
  %568 = vmatprep.subr.bf16.mxu0 0
  %569 = vmatpush1.bf16.msra.mxu0 0
  %570 = vmatprep.subr.bf16.mxu0 0
  %571 = vmatpush1.bf16.msra.mxu0 0
  %572 = vmatprep.subr.bf16.mxu0 0
  %573 = vmatpush1.bf16.msra.mxu0 0
  %574 = vmatprep.subr.bf16.mxu0 0
  %575 = vmatpush1.bf16.msra.mxu0 0
  %576 = vmatprep.subr.bf16.mxu0 0
  %577 = vmatpush1.bf16.msra.mxu0 0
  %578 = vmatprep.subr.bf16.mxu0 0
  %579 = vmatpush1.bf16.msra.mxu0 0
  %580 = vmatprep.subr.bf16.mxu0 0
  %581 = vmatpush1.bf16.msra.mxu0 0
  %582 = vmatprep.subr.bf16.mxu0 0
  %583 = vmatpush1.bf16.msra.mxu0 0
  %584 = vmatprep.subr.bf16.mxu0 0
  %585 = vmatpush1.bf16.msra.mxu0 0
  %586 = vmatprep.mubr.bf16.mxu0 0
  %587 = vmatmul.mubr.bf16.gmra.mrb[0].mxu0 %v549
  %v588 = vpop.f32.mrb[0].mxu0
  %v589 = vadd.f32 0.0, %v588
  %v590 = vpop.f32.mrb[0].mxu0
  %v591 = vadd.f32 0.0, %v590
  %v592 = vpop.f32.mrb[0].mxu0
  %v593 = vadd.f32 0.0, %v592
  %v594 = vpop.f32.mrb[0].mxu0
  %v595 = vadd.f32 0.0, %v594
  %596 = vmatprep.mubr.bf16.mxu0 0
  %597 = vmatmul.mubr.bf16.gmra.mrb[0].mxu0 %v552
  %v598 = vpop.f32.mrb[0].mxu0
  %v599 = vadd.f32 0.0, %v598
  %v600 = vpop.f32.mrb[0].mxu0
  %v601 = vadd.f32 0.0, %v600
  %v602 = vpop.f32.mrb[0].mxu0
  %v603 = vadd.f32 0.0, %v602
  %v604 = vpop.f32.mrb[0].mxu0
  %v605 = vadd.f32 0.0, %v604
  %606 = vdwg.mxu0
  %v607 = vadd.f32 %v504, %v589
  %v608 = vadd.f32 %v505, %v591
  %v609 = vadd.f32 %v506, %v593
  %v610 = vadd.f32 %v507, %v595
  %v611 = vadd.f32 %v508, %v599
  %v612 = vadd.f32 %v509, %v601
  %v613 = vadd.f32 %v510, %v603
  %v614 = vadd.f32 %v511, %v605
  %s615 = scalar_lea.vmem %s0, 80
  %v616 = vld [vmem:[%s615] sm:$0xf]
  %v617 = vld [vmem:[%s615 + $0x4] sm:$0xf]
  %v618 = vld [vmem:[%s615 + $0x8] sm:$0xf]
  %v619 = vld [vmem:[%s615 + $0xc] sm:$0xf]
  %v624 = vunpack.c.l.b16 %v616
  %v625 = vunpack.c.l.b16 %v617
  %v626 = vunpack.c.l.b16 %v618
  %v627 = vunpack.c.l.b16 %v619
  %v628 = vpack.c.b16 %v625, %v624
  %v629 = vpack.c.b16 %v627, %v626
  %630 = vrot.lane.b32.xlu0 %v185, 110
  %v631 = vpop.permute.xlu0 %630
  %632 = vrot.lane.b32.xlu0 %v186, 110
  %v633 = vpop.permute.xlu0 %632
  %634 = vrot.lane.b32.xlu0 %v187, 110
  %v635 = vpop.permute.xlu0 %634
  %636 = vrot.lane.b32.xlu0 %v188, 110
  %v637 = vpop.permute.xlu0 %636
  %638 = vrot.lane.b32.xlu0 %v189, 110
  %v639 = vpop.permute.xlu0 %638
  %640 = vrot.lane.b32.xlu0 %v190, 110
  %v641 = vpop.permute.xlu0 %640
  %vm642 = vcmask 900096
  %v643 = vsel %vm642, %v631, %v633
  %v644 = vsel %vm642, %v633, %v635
  %v645 = vsel %vm642, %v637, %v639
  %v646 = vsel %vm642, %v639, %v641
  %v652 = vsel %vm63, %v628, 0
  %v655 = vsel %vm63, %v629, 0
  %657 = vmatprep.subr.bf16.mxu0 %v644
  %658 = vmatpush1.bf16.msra.mxu0 %v643
  %659 = vmatprep.subr.bf16.mxu0 %v646
  %660 = vmatpush1.bf16.msra.mxu0 %v645
  %661 = vmatprep.subr.bf16.mxu0 0
  %662 = vmatpush1.bf16.msra.mxu0 0
  %663 = vmatprep.subr.bf16.mxu0 0
  %664 = vmatpush1.bf16.msra.mxu0 0
  %665 = vmatprep.subr.bf16.mxu0 0
  %666 = vmatpush1.bf16.msra.mxu0 0
  %667 = vmatprep.subr.bf16.mxu0 0
  %668 = vmatpush1.bf16.msra.mxu0 0
  %669 = vmatprep.subr.bf16.mxu0 0
  %670 = vmatpush1.bf16.msra.mxu0 0
  %671 = vmatprep.subr.bf16.mxu0 0
  %672 = vmatpush1.bf16.msra.mxu0 0
  %673 = vmatprep.subr.bf16.mxu0 0
  %674 = vmatpush1.bf16.msra.mxu0 0
  %675 = vmatprep.subr.bf16.mxu0 0
  %676 = vmatpush1.bf16.msra.mxu0 0
  %677 = vmatprep.subr.bf16.mxu0 0
  %678 = vmatpush1.bf16.msra.mxu0 0
  %679 = vmatprep.subr.bf16.mxu0 0
  %680 = vmatpush1.bf16.msra.mxu0 0
  %681 = vmatprep.subr.bf16.mxu0 0
  %682 = vmatpush1.bf16.msra.mxu0 0
  %683 = vmatprep.subr.bf16.mxu0 0
  %684 = vmatpush1.bf16.msra.mxu0 0
  %685 = vmatprep.subr.bf16.mxu0 0
  %686 = vmatpush1.bf16.msra.mxu0 0
  %687 = vmatprep.subr.bf16.mxu0 0
  %688 = vmatpush1.bf16.msra.mxu0 0
  %689 = vmatprep.mubr.bf16.mxu0 0
  %690 = vmatmul.mubr.bf16.gmra.mrb[0].mxu0 %v652
  %v691 = vpop.f32.mrb[0].mxu0
  %v692 = vadd.f32 0.0, %v691
  %v693 = vpop.f32.mrb[0].mxu0
  %v694 = vadd.f32 0.0, %v693
  %v695 = vpop.f32.mrb[0].mxu0
  %v696 = vadd.f32 0.0, %v695
  %v697 = vpop.f32.mrb[0].mxu0
  %v698 = vadd.f32 0.0, %v697
  %699 = vmatprep.mubr.bf16.mxu0 0
  %700 = vmatmul.mubr.bf16.gmra.mrb[0].mxu0 %v655
  %v701 = vpop.f32.mrb[0].mxu0
  %v702 = vadd.f32 0.0, %v701
  %v703 = vpop.f32.mrb[0].mxu0
  %v704 = vadd.f32 0.0, %v703
  %v705 = vpop.f32.mrb[0].mxu0
  %v706 = vadd.f32 0.0, %v705
  %v707 = vpop.f32.mrb[0].mxu0
  %v708 = vadd.f32 0.0, %v707
  %709 = vdwg.mxu0
  %v710 = vmul.f32 %v692, %v378
  %v711 = vmul.f32 %v694, %v382
  %v712 = vmul.f32 %v696, %v378
  %v713 = vmul.f32 %v698, %v382
  %v714 = vmul.f32 %v702, %v378
  %v715 = vmul.f32 %v704, %v382
  %v716 = vmul.f32 %v706, %v378
  %v717 = vmul.f32 %v708, %v382
  %v718 = vadd.f32 %v607, %v710
  %v719 = vadd.f32 %v608, %v711
  %v720 = vadd.f32 %v609, %v712
  %v721 = vadd.f32 %v610, %v713
  %v722 = vadd.f32 %v611, %v714
  %v723 = vadd.f32 %v612, %v715
  %v724 = vadd.f32 %v613, %v716
  %v725 = vadd.f32 %v614, %v717
  %s726 = scalar_lea.vmem %s0, 96
  %v727 = vld [vmem:[%s726] sm:$0xf]
  %v728 = vld [vmem:[%s726 + $0x4] sm:$0xf]
  %v729 = vld [vmem:[%s726 + $0x8] sm:$0xf]
  %v730 = vld [vmem:[%s726 + $0xc] sm:$0xf]
  %v735 = vunpack.c.l.b16 %v727
  %v736 = vunpack.c.l.b16 %v728
  %v737 = vunpack.c.l.b16 %v729
  %v738 = vunpack.c.l.b16 %v730
  %v739 = vpack.c.b16 %v736, %v735
  %v740 = vpack.c.b16 %v738, %v737
  %741 = vrot.lane.b32.xlu0 %v185, 96
  %v742 = vpop.permute.xlu0 %741
  %743 = vrot.lane.b32.xlu0 %v186, 96
  %v744 = vpop.permute.xlu0 %743
  %745 = vrot.lane.b32.xlu0 %v187, 96
  %v746 = vpop.permute.xlu0 %745
  %747 = vrot.lane.b32.xlu0 %v188, 96
  %v748 = vpop.permute.xlu0 %747
  %749 = vrot.lane.b32.xlu0 %v189, 96
  %v750 = vpop.permute.xlu0 %749
  %751 = vrot.lane.b32.xlu0 %v190, 96
  %v752 = vpop.permute.xlu0 %751
  %vm753 = vcmask 785408
  %v754 = vsel %vm753, %v742, %v744
  %v755 = vsel %vm753, %v744, %v746
  %v756 = vsel %vm753, %v748, %v750
  %v757 = vsel %vm753, %v750, %v752
  %v763 = vsel %vm63, %v739, 0
  %v766 = vsel %vm63, %v740, 0
  %768 = vmatprep.subr.bf16.mxu0 %v755
  %769 = vmatpush1.bf16.msra.mxu0 %v754
  %770 = vmatprep.subr.bf16.mxu0 %v757
  %771 = vmatpush1.bf16.msra.mxu0 %v756
  %772 = vmatprep.subr.bf16.mxu0 0
  %773 = vmatpush1.bf16.msra.mxu0 0
  %774 = vmatprep.subr.bf16.mxu0 0
  %775 = vmatpush1.bf16.msra.mxu0 0
  %776 = vmatprep.subr.bf16.mxu0 0
  %777 = vmatpush1.bf16.msra.mxu0 0
  %778 = vmatprep.subr.bf16.mxu0 0
  %779 = vmatpush1.bf16.msra.mxu0 0
  %780 = vmatprep.subr.bf16.mxu0 0
  %781 = vmatpush1.bf16.msra.mxu0 0
  %782 = vmatprep.subr.bf16.mxu0 0
  %783 = vmatpush1.bf16.msra.mxu0 0
  %784 = vmatprep.subr.bf16.mxu0 0
  %785 = vmatpush1.bf16.msra.mxu0 0
  %786 = vmatprep.subr.bf16.mxu0 0
  %787 = vmatpush1.bf16.msra.mxu0 0
  %788 = vmatprep.subr.bf16.mxu0 0
  %789 = vmatpush1.bf16.msra.mxu0 0
  %790 = vmatprep.subr.bf16.mxu0 0
  %791 = vmatpush1.bf16.msra.mxu0 0
  %792 = vmatprep.subr.bf16.mxu0 0
  %793 = vmatpush1.bf16.msra.mxu0 0
  %794 = vmatprep.subr.bf16.mxu0 0
  %795 = vmatpush1.bf16.msra.mxu0 0
  %796 = vmatprep.subr.bf16.mxu0 0
  %797 = vmatpush1.bf16.msra.mxu0 0
  %798 = vmatprep.subr.bf16.mxu0 0
  %799 = vmatpush1.bf16.msra.mxu0 0
  %800 = vmatprep.mubr.bf16.mxu0 0
  %801 = vmatmul.mubr.bf16.gmra.mrb[0].mxu0 %v763
  %v802 = vpop.f32.mrb[0].mxu0
  %v803 = vadd.f32 0.0, %v802
  %v804 = vpop.f32.mrb[0].mxu0
  %v805 = vadd.f32 0.0, %v804
  %v806 = vpop.f32.mrb[0].mxu0
  %v807 = vadd.f32 0.0, %v806
  %v808 = vpop.f32.mrb[0].mxu0
  %v809 = vadd.f32 0.0, %v808
  %810 = vmatprep.mubr.bf16.mxu0 0
  %811 = vmatmul.mubr.bf16.gmra.mrb[0].mxu0 %v766
  %v812 = vpop.f32.mrb[0].mxu0
  %v813 = vadd.f32 0.0, %v812
  %v814 = vpop.f32.mrb[0].mxu0
  %v815 = vadd.f32 0.0, %v814
  %v816 = vpop.f32.mrb[0].mxu0
  %v817 = vadd.f32 0.0, %v816
  %v818 = vpop.f32.mrb[0].mxu0
  %v819 = vadd.f32 0.0, %v818
  %820 = vdwg.mxu0
  %v821 = vmul.f32 %v803, %v127
  %v822 = vmul.f32 %v805, %v131
  %v823 = vmul.f32 %v807, %v127
  %v824 = vmul.f32 %v809, %v131
  %v825 = vmul.f32 %v813, %v127
  %v826 = vmul.f32 %v815, %v131
  %v827 = vmul.f32 %v817, %v127
  %v828 = vmul.f32 %v819, %v131
  %v829 = vadd.f32 %v718, %v821
  %v830 = vadd.f32 %v719, %v822
  %v831 = vadd.f32 %v720, %v823
  %v832 = vadd.f32 %v721, %v824
  %v833 = vadd.f32 %v722, %v825
  %v834 = vadd.f32 %v723, %v826
  %v835 = vadd.f32 %v724, %v827
  %v836 = vadd.f32 %v725, %v828
  %s837 = scalar_lea.vmem %s0, 112
  %v838 = vld [vmem:[%s837] sm:$0xf]
  %v839 = vld [vmem:[%s837 + $0x4] sm:$0xf]
  %v840 = vld [vmem:[%s837 + $0x8] sm:$0xf]
  %v841 = vld [vmem:[%s837 + $0xc] sm:$0xf]
  %v846 = vunpack.c.l.b16 %v838
  %v847 = vunpack.c.l.b16 %v839
  %v848 = vunpack.c.l.b16 %v840
  %v849 = vunpack.c.l.b16 %v841
  %v850 = vpack.c.b16 %v847, %v846
  %v851 = vpack.c.b16 %v849, %v848
  %852 = vrot.lane.b32.xlu0 %v185, 95
  %v853 = vpop.permute.xlu0 %852
  %854 = vrot.lane.b32.xlu0 %v186, 95
  %v855 = vpop.permute.xlu0 %854
  %856 = vrot.lane.b32.xlu0 %v187, 95
  %v857 = vpop.permute.xlu0 %856
  %858 = vrot.lane.b32.xlu0 %v188, 95
  %v859 = vpop.permute.xlu0 %858
  %860 = vrot.lane.b32.xlu0 %v189, 95
  %v861 = vpop.permute.xlu0 %860
  %862 = vrot.lane.b32.xlu0 %v190, 95
  %v863 = vpop.permute.xlu0 %862
  %vm864 = vcmask 777216
  %v865 = vsel %vm864, %v853, %v855
  %v866 = vsel %vm864, %v855, %v857
  %v867 = vsel %vm864, %v859, %v861
  %v868 = vsel %vm864, %v861, %v863
  %v874 = vsel %vm63, %v850, 0
  %v877 = vsel %vm63, %v851, 0
  %879 = vmatprep.subr.bf16.mxu0 %v866
  %880 = vmatpush1.bf16.msra.mxu0 %v865
  %881 = vmatprep.subr.bf16.mxu0 %v868
  %882 = vmatpush1.bf16.msra.mxu0 %v867
  %883 = vmatprep.subr.bf16.mxu0 0
  %884 = vmatpush1.bf16.msra.mxu0 0
  %885 = vmatprep.subr.bf16.mxu0 0
  %886 = vmatpush1.bf16.msra.mxu0 0
  %887 = vmatprep.subr.bf16.mxu0 0
  %888 = vmatpush1.bf16.msra.mxu0 0
  %889 = vmatprep.subr.bf16.mxu0 0
  %890 = vmatpush1.bf16.msra.mxu0 0
  %891 = vmatprep.subr.bf16.mxu0 0
  %892 = vmatpush1.bf16.msra.mxu0 0
  %893 = vmatprep.subr.bf16.mxu0 0
  %894 = vmatpush1.bf16.msra.mxu0 0
  %895 = vmatprep.subr.bf16.mxu0 0
  %896 = vmatpush1.bf16.msra.mxu0 0
  %897 = vmatprep.subr.bf16.mxu0 0
  %898 = vmatpush1.bf16.msra.mxu0 0
  %899 = vmatprep.subr.bf16.mxu0 0
  %900 = vmatpush1.bf16.msra.mxu0 0
  %901 = vmatprep.subr.bf16.mxu0 0
  %902 = vmatpush1.bf16.msra.mxu0 0
  %903 = vmatprep.subr.bf16.mxu0 0
  %904 = vmatpush1.bf16.msra.mxu0 0
  %905 = vmatprep.subr.bf16.mxu0 0
  %906 = vmatpush1.bf16.msra.mxu0 0
  %907 = vmatprep.subr.bf16.mxu0 0
  %908 = vmatpush1.bf16.msra.mxu0 0
  %909 = vmatprep.subr.bf16.mxu0 0
  %910 = vmatpush1.bf16.msra.mxu0 0
  %911 = vmatprep.mubr.bf16.mxu0 0
  %912 = vmatmul.mubr.bf16.gmra.mrb[0].mxu0 %v874
  %v913 = vpop.f32.mrb[0].mxu0
  %v914 = vadd.f32 0.0, %v913
  %v915 = vpop.f32.mrb[0].mxu0
  %v916 = vadd.f32 0.0, %v915
  %v917 = vpop.f32.mrb[0].mxu0
  %v918 = vadd.f32 0.0, %v917
  %v919 = vpop.f32.mrb[0].mxu0
  %v920 = vadd.f32 0.0, %v919
  %921 = vmatprep.mubr.bf16.mxu0 0
  %922 = vmatmul.mubr.bf16.gmra.mrb[0].mxu0 %v877
  %v923 = vpop.f32.mrb[0].mxu0
  %v924 = vadd.f32 0.0, %v923
  %v925 = vpop.f32.mrb[0].mxu0
  %v926 = vadd.f32 0.0, %v925
  %v927 = vpop.f32.mrb[0].mxu0
  %v928 = vadd.f32 0.0, %v927
  %v929 = vpop.f32.mrb[0].mxu0
  %v930 = vadd.f32 0.0, %v929
  %931 = vdwg.mxu0
  %v932 = vadd.f32 %v829, %v914
  %v933 = vadd.f32 %v830, %v916
  %v934 = vadd.f32 %v831, %v918
  %v935 = vadd.f32 %v832, %v920
  %v936 = vadd.f32 %v833, %v924
  %v937 = vadd.f32 %v834, %v926
  %v938 = vadd.f32 %v835, %v928
  %v939 = vadd.f32 %v836, %v930
  %s940 = scalar_lea.vmem %s0, 128
  %v941 = vld [vmem:[%s940] sm:$0xf]
  %v942 = vld [vmem:[%s940 + $0x4] sm:$0xf]
  %v943 = vld [vmem:[%s940 + $0x8] sm:$0xf]
  %v944 = vld [vmem:[%s940 + $0xc] sm:$0xf]
  %v949 = vunpack.c.l.b16 %v941
  %v950 = vunpack.c.l.b16 %v942
  %v951 = vunpack.c.l.b16 %v943
  %v952 = vunpack.c.l.b16 %v944
  %v953 = vpack.c.b16 %v950, %v949
  %v954 = vpack.c.b16 %v952, %v951
  %955 = vrot.lane.b32.xlu0 %v185, 94
  %v956 = vpop.permute.xlu0 %955
  %957 = vrot.lane.b32.xlu0 %v186, 94
  %v958 = vpop.permute.xlu0 %957
  %959 = vrot.lane.b32.xlu0 %v187, 94
  %v960 = vpop.permute.xlu0 %959
  %961 = vrot.lane.b32.xlu0 %v188, 94
  %v962 = vpop.permute.xlu0 %961
  %963 = vrot.lane.b32.xlu0 %v189, 94
  %v964 = vpop.permute.xlu0 %963
  %965 = vrot.lane.b32.xlu0 %v190, 94
  %v966 = vpop.permute.xlu0 %965
  %vm967 = vcmask 769024
  %v968 = vsel %vm967, %v956, %v958
  %v969 = vsel %vm967, %v958, %v960
  %v970 = vsel %vm967, %v962, %v964
  %v971 = vsel %vm967, %v964, %v966
  %v977 = vsel %vm63, %v953, 0
  %v980 = vsel %vm63, %v954, 0
  %982 = vmatprep.subr.bf16.mxu0 %v969
  %983 = vmatpush1.bf16.msra.mxu0 %v968
  %984 = vmatprep.subr.bf16.mxu0 %v971
  %985 = vmatpush1.bf16.msra.mxu0 %v970
  %986 = vmatprep.subr.bf16.mxu0 0
  %987 = vmatpush1.bf16.msra.mxu0 0
  %988 = vmatprep.subr.bf16.mxu0 0
  %989 = vmatpush1.bf16.msra.mxu0 0
  %990 = vmatprep.subr.bf16.mxu0 0
  %991 = vmatpush1.bf16.msra.mxu0 0
  %992 = vmatprep.subr.bf16.mxu0 0
  %993 = vmatpush1.bf16.msra.mxu0 0
  %994 = vmatprep.subr.bf16.mxu0 0
  %995 = vmatpush1.bf16.msra.mxu0 0
  %996 = vmatprep.subr.bf16.mxu0 0
  %997 = vmatpush1.bf16.msra.mxu0 0
  %998 = vmatprep.subr.bf16.mxu0 0
  %999 = vmatpush1.bf16.msra.mxu0 0
  %1000 = vmatprep.subr.bf16.mxu0 0
  %1001 = vmatpush1.bf16.msra.mxu0 0
  %1002 = vmatprep.subr.bf16.mxu0 0
  %1003 = vmatpush1.bf16.msra.mxu0 0
  %1004 = vmatprep.subr.bf16.mxu0 0
  %1005 = vmatpush1.bf16.msra.mxu0 0
  %1006 = vmatprep.subr.bf16.mxu0 0
  %1007 = vmatpush1.bf16.msra.mxu0 0
  %1008 = vmatprep.subr.bf16.mxu0 0
  %1009 = vmatpush1.bf16.msra.mxu0 0
  %1010 = vmatprep.subr.bf16.mxu0 0
  %1011 = vmatpush1.bf16.msra.mxu0 0
  %1012 = vmatprep.subr.bf16.mxu0 0
  %1013 = vmatpush1.bf16.msra.mxu0 0
  %1014 = vmatprep.mubr.bf16.mxu0 0
  %1015 = vmatmul.mubr.bf16.gmra.mrb[0].mxu0 %v977
  %v1016 = vpop.f32.mrb[0].mxu0
  %v1017 = vadd.f32 0.0, %v1016
  %v1018 = vpop.f32.mrb[0].mxu0
  %v1019 = vadd.f32 0.0, %v1018
  %v1020 = vpop.f32.mrb[0].mxu0
  %v1021 = vadd.f32 0.0, %v1020
  %v1022 = vpop.f32.mrb[0].mxu0
  %v1023 = vadd.f32 0.0, %v1022
  %1024 = vmatprep.mubr.bf16.mxu0 0
  %1025 = vmatmul.mubr.bf16.gmra.mrb[0].mxu0 %v980
  %v1026 = vpop.f32.mrb[0].mxu0
  %v1027 = vadd.f32 0.0, %v1026
  %v1028 = vpop.f32.mrb[0].mxu0
  %v1029 = vadd.f32 0.0, %v1028
  %v1030 = vpop.f32.mrb[0].mxu0
  %v1031 = vadd.f32 0.0, %v1030
  %v1032 = vpop.f32.mrb[0].mxu0
  %v1033 = vadd.f32 0.0, %v1032
  %1034 = vdwg.mxu0
  %v1035 = vmul.f32 %v1017, %v378
  %v1036 = vmul.f32 %v1019, %v382
  %v1037 = vmul.f32 %v1021, %v378
  %v1038 = vmul.f32 %v1023, %v382
  %v1039 = vmul.f32 %v1027, %v378
  %v1040 = vmul.f32 %v1029, %v382
  %v1041 = vmul.f32 %v1031, %v378
  %v1042 = vmul.f32 %v1033, %v382
  %v1043 = vadd.f32 %v932, %v1035
  %v1044 = vadd.f32 %v933, %v1036
  %v1045 = vadd.f32 %v934, %v1037
  %v1046 = vadd.f32 %v935, %v1038
  %v1047 = vadd.f32 %v936, %v1039
  %v1048 = vadd.f32 %v937, %v1040
  %v1049 = vadd.f32 %v938, %v1041
  %v1050 = vadd.f32 %v939, %v1042
  %1052 = vset.pattern.permute.xlu0 0
  %1053 = vperm.xlu0 %1052, %v18
  %v1054 = vpop.permute.xlu0 %1053
  %1057 = vset.pattern.permute.xlu0 0
  %1058 = vperm.xlu0 %1057, %v19
  %v1059 = vpop.permute.xlu0 %1058
  %1062 = vset.pattern.permute.xlu0 0
  %1063 = vperm.xlu0 %1062, %v20
  %v1064 = vpop.permute.xlu0 %1063
  %1067 = vset.pattern.permute.xlu0 0
  %1068 = vperm.xlu0 %1067, %v21
  %v1069 = vpop.permute.xlu0 %1068
  %v1071 = vadd.f32 %v1043, %v1054
  %v1072 = vadd.f32 %v1044, %v1054
  %v1073 = vadd.f32 %v1045, %v1059
  %v1074 = vadd.f32 %v1046, %v1059
  %v1075 = vadd.f32 %v1047, %v1064
  %v1076 = vadd.f32 %v1048, %v1064
  %v1077 = vadd.f32 %v1049, %v1069
  %v1078 = vadd.f32 %v1050, %v1069
  %v1079 = vmul.f32 %v1071, 0.5
  %v1080 = vmul.f32 %v1072, 0.5
  %v1081 = vmul.f32 %v1073, 0.5
  %v1082 = vmul.f32 %v1074, 0.5
  %v1083 = vmul.f32 %v1075, 0.5
  %v1084 = vmul.f32 %v1076, 0.5
  %v1085 = vmul.f32 %v1077, 0.5
  %v1086 = vmul.f32 %v1078, 0.5
  %v1087 = vmul.f32 %v1071, 0.70710677
  %v1088 = vmul.f32 %v1072, 0.70710677
  %v1089 = vmul.f32 %v1073, 0.70710677
  %v1090 = vmul.f32 %v1074, 0.70710677
  %v1091 = vmul.f32 %v1075, 0.70710677
  %v1092 = vmul.f32 %v1076, 0.70710677
  %v1093 = vmul.f32 %v1077, 0.70710677
  %v1094 = vmul.f32 %v1078, 0.70710677
  %v1095 = vand.u32 2147483647, %v1087
  %v1096 = vand.u32 2147483647, %v1088
  %v1097 = vand.u32 2147483647, %v1089
  %v1098 = vand.u32 2147483647, %v1090
  %v1099 = vand.u32 2147483647, %v1091
  %v1100 = vand.u32 2147483647, %v1092
  %v1101 = vand.u32 2147483647, %v1093
  %v1102 = vand.u32 2147483647, %v1094
  %v1103 = vmul.f32 %v1095, 0.3275911
  %v1104 = vmul.f32 %v1096, 0.3275911
  %v1105 = vmul.f32 %v1097, 0.3275911
  %v1106 = vmul.f32 %v1098, 0.3275911
  %v1107 = vmul.f32 %v1099, 0.3275911
  %v1108 = vmul.f32 %v1100, 0.3275911
  %v1109 = vmul.f32 %v1101, 0.3275911
  %v1110 = vmul.f32 %v1102, 0.3275911
  %v1111 = vadd.f32 %v1103, 1.0
  %v1112 = vadd.f32 %v1104, 1.0
  %v1113 = vadd.f32 %v1105, 1.0
  %v1114 = vadd.f32 %v1106, 1.0
  %v1115 = vadd.f32 %v1107, 1.0
  %v1116 = vadd.f32 %v1108, 1.0
  %v1117 = vadd.f32 %v1109, 1.0
  %v1118 = vadd.f32 %v1110, 1.0
  %v1119 = vrcp.pop %v1111
  %v1120 = vrcp.pop %v1112
  %v1121 = vrcp.pop %v1113
  %v1122 = vrcp.pop %v1114
  %v1123 = vrcp.pop %v1115
  %v1124 = vrcp.pop %v1116
  %v1125 = vrcp.pop %v1117
  %v1126 = vrcp.pop %v1118
  %v1127 = vmul.f32 %v1119, 1.0614054
  %v1128 = vmul.f32 %v1120, 1.0614054
  %v1129 = vmul.f32 %v1121, 1.0614054
  %v1130 = vmul.f32 %v1122, 1.0614054
  %v1131 = vmul.f32 %v1123, 1.0614054
  %v1132 = vmul.f32 %v1124, 1.0614054
  %v1133 = vmul.f32 %v1125, 1.0614054
  %v1134 = vmul.f32 %v1126, 1.0614054
  %v1135 = vadd.f32 %v1127, -1.4531521
  %v1136 = vadd.f32 %v1128, -1.4531521
  %v1137 = vadd.f32 %v1129, -1.4531521
  %v1138 = vadd.f32 %v1130, -1.4531521
  %v1139 = vadd.f32 %v1131, -1.4531521
  %v1140 = vadd.f32 %v1132, -1.4531521
  %v1141 = vadd.f32 %v1133, -1.4531521
  %v1142 = vadd.f32 %v1134, -1.4531521
  %v1143 = vmul.f32 %v1135, %v1119
  %v1144 = vmul.f32 %v1136, %v1120
  %v1145 = vmul.f32 %v1137, %v1121
  %v1146 = vmul.f32 %v1138, %v1122
  %v1147 = vmul.f32 %v1139, %v1123
  %v1148 = vmul.f32 %v1140, %v1124
  %v1149 = vmul.f32 %v1141, %v1125
  %v1150 = vmul.f32 %v1142, %v1126
  %v1151 = vadd.f32 %v1143, 1.4214138
  %v1152 = vadd.f32 %v1144, 1.4214138
  %v1153 = vadd.f32 %v1145, 1.4214138
  %v1154 = vadd.f32 %v1146, 1.4214138
  %v1155 = vadd.f32 %v1147, 1.4214138
  %v1156 = vadd.f32 %v1148, 1.4214138
  %v1157 = vadd.f32 %v1149, 1.4214138
  %v1158 = vadd.f32 %v1150, 1.4214138
  %v1159 = vmul.f32 %v1151, %v1119
  %v1160 = vmul.f32 %v1152, %v1120
  %v1161 = vmul.f32 %v1153, %v1121
  %v1162 = vmul.f32 %v1154, %v1122
  %v1163 = vmul.f32 %v1155, %v1123
  %v1164 = vmul.f32 %v1156, %v1124
  %v1165 = vmul.f32 %v1157, %v1125
  %v1166 = vmul.f32 %v1158, %v1126
  %v1167 = vadd.f32 %v1159, -0.28449672
  %v1168 = vadd.f32 %v1160, -0.28449672
  %v1169 = vadd.f32 %v1161, -0.28449672
  %v1170 = vadd.f32 %v1162, -0.28449672
  %v1171 = vadd.f32 %v1163, -0.28449672
  %v1172 = vadd.f32 %v1164, -0.28449672
  %v1173 = vadd.f32 %v1165, -0.28449672
  %v1174 = vadd.f32 %v1166, -0.28449672
  %v1175 = vmul.f32 %v1167, %v1119
  %v1176 = vmul.f32 %v1168, %v1120
  %v1177 = vmul.f32 %v1169, %v1121
  %v1178 = vmul.f32 %v1170, %v1122
  %v1179 = vmul.f32 %v1171, %v1123
  %v1180 = vmul.f32 %v1172, %v1124
  %v1181 = vmul.f32 %v1173, %v1125
  %v1182 = vmul.f32 %v1174, %v1126
  %v1183 = vadd.f32 %v1175, 0.2548296
  %v1184 = vadd.f32 %v1176, 0.2548296
  %v1185 = vadd.f32 %v1177, 0.2548296
  %v1186 = vadd.f32 %v1178, 0.2548296
  %v1187 = vadd.f32 %v1179, 0.2548296
  %v1188 = vadd.f32 %v1180, 0.2548296
  %v1189 = vadd.f32 %v1181, 0.2548296
  %v1190 = vadd.f32 %v1182, 0.2548296
  %v1191 = vmul.f32 %v1183, %v1119
  %v1192 = vmul.f32 %v1184, %v1120
  %v1193 = vmul.f32 %v1185, %v1121
  %v1194 = vmul.f32 %v1186, %v1122
  %v1195 = vmul.f32 %v1187, %v1123
  %v1196 = vmul.f32 %v1188, %v1124
  %v1197 = vmul.f32 %v1189, %v1125
  %v1198 = vmul.f32 %v1190, %v1126
  %v1199 = vsub.f32 0.0, %v1095
  %v1200 = vsub.f32 0.0, %v1096
  %v1201 = vsub.f32 0.0, %v1097
  %v1202 = vsub.f32 0.0, %v1098
  %v1203 = vsub.f32 0.0, %v1099
  %v1204 = vsub.f32 0.0, %v1100
  %v1205 = vsub.f32 0.0, %v1101
  %v1206 = vsub.f32 0.0, %v1102
  %v1207 = vmul.f32 %v1199, %v1095
  %v1208 = vmul.f32 %v1200, %v1096
  %v1209 = vmul.f32 %v1201, %v1097
  %v1210 = vmul.f32 %v1202, %v1098
  %v1211 = vmul.f32 %v1203, %v1099
  %v1212 = vmul.f32 %v1204, %v1100
  %v1213 = vmul.f32 %v1205, %v1101
  %v1214 = vmul.f32 %v1206, %v1102
  %v1215 = vmul.f32 %v1207, 1.442695
  %v1216 = vpow.pop %v1215
  %v1217 = vmul.f32 %v1208, 1.442695
  %v1218 = vpow.pop %v1217
  %v1219 = vmul.f32 %v1209, 1.442695
  %v1220 = vpow.pop %v1219
  %v1221 = vmul.f32 %v1210, 1.442695
  %v1222 = vpow.pop %v1221
  %v1223 = vmul.f32 %v1211, 1.442695
  %v1224 = vpow.pop %v1223
  %v1225 = vmul.f32 %v1212, 1.442695
  %v1226 = vpow.pop %v1225
  %v1227 = vmul.f32 %v1213, 1.442695
  %v1228 = vpow.pop %v1227
  %v1229 = vmul.f32 %v1214, 1.442695
  %v1230 = vpow.pop %v1229
  %v1231 = vmul.f32 %v1191, %v1216
  %v1232 = vmul.f32 %v1192, %v1218
  %v1233 = vmul.f32 %v1193, %v1220
  %v1234 = vmul.f32 %v1194, %v1222
  %v1235 = vmul.f32 %v1195, %v1224
  %v1236 = vmul.f32 %v1196, %v1226
  %v1237 = vmul.f32 %v1197, %v1228
  %v1238 = vmul.f32 %v1198, %v1230
  %v1239 = vsub.f32 1.0, %v1231
  %v1240 = vsub.f32 1.0, %v1232
  %v1241 = vsub.f32 1.0, %v1233
  %v1242 = vsub.f32 1.0, %v1234
  %v1243 = vsub.f32 1.0, %v1235
  %v1244 = vsub.f32 1.0, %v1236
  %v1245 = vsub.f32 1.0, %v1237
  %v1246 = vsub.f32 1.0, %v1238
  %vm1247 = vcmp.ge.f32.partialorder %v1087, 0.0
  %vm1248 = vcmp.ge.f32.partialorder %v1088, 0.0
  %vm1249 = vcmp.ge.f32.partialorder %v1089, 0.0
  %vm1250 = vcmp.ge.f32.partialorder %v1090, 0.0
  %vm1251 = vcmp.ge.f32.partialorder %v1091, 0.0
  %vm1252 = vcmp.ge.f32.partialorder %v1092, 0.0
  %vm1253 = vcmp.ge.f32.partialorder %v1093, 0.0
  %vm1254 = vcmp.ge.f32.partialorder %v1094, 0.0
  %v1255 = vsub.f32 0.0, %v1239
  %v1256 = vsub.f32 0.0, %v1240
  %v1257 = vsub.f32 0.0, %v1241
  %v1258 = vsub.f32 0.0, %v1242
  %v1259 = vsub.f32 0.0, %v1243
  %v1260 = vsub.f32 0.0, %v1244
  %v1261 = vsub.f32 0.0, %v1245
  %v1262 = vsub.f32 0.0, %v1246
  %v1263 = vsel %vm1247, %v1239, %v1255
  %v1264 = vsel %vm1248, %v1240, %v1256
  %v1265 = vsel %vm1249, %v1241, %v1257
  %v1266 = vsel %vm1250, %v1242, %v1258
  %v1267 = vsel %vm1251, %v1243, %v1259
  %v1268 = vsel %vm1252, %v1244, %v1260
  %v1269 = vsel %vm1253, %v1245, %v1261
  %v1270 = vsel %vm1254, %v1246, %v1262
  %v1271 = vadd.f32 %v1263, 1.0
  %v1272 = vadd.f32 %v1264, 1.0
  %v1273 = vadd.f32 %v1265, 1.0
  %v1274 = vadd.f32 %v1266, 1.0
  %v1275 = vadd.f32 %v1267, 1.0
  %v1276 = vadd.f32 %v1268, 1.0
  %v1277 = vadd.f32 %v1269, 1.0
  %v1278 = vadd.f32 %v1270, 1.0
  %v1279 = vmul.f32 %v1079, %v1271
  %v1280 = vmul.f32 %v1080, %v1272
  %v1281 = vmul.f32 %v1081, %v1273
  %v1282 = vmul.f32 %v1082, %v1274
  %v1283 = vmul.f32 %v1083, %v1275
  %v1284 = vmul.f32 %v1084, %v1276
  %v1285 = vmul.f32 %v1085, %v1277
  %v1286 = vmul.f32 %v1086, %v1278
  %1287 = vst [vmem:[%s4] sm:$0xff] %v1279
  %1288 = vst [vmem:[%s4 + $0x8] sm:$0xff] %v1280
  %1289 = vst [vmem:[%s4 + $0x10] sm:$0xff] %v1281
  %1290 = vst [vmem:[%s4 + $0x18] sm:$0xff] %v1282
  %1291 = vst [vmem:[%s4 + $0x20] sm:$0xff] %v1283
  %1292 = vst [vmem:[%s4 + $0x28] sm:$0xff] %v1284
  %1293 = vst [vmem:[%s4 + $0x30] sm:$0xff] %v1285
  %1294 = vst [vmem:[%s4 + $0x38] sm:$0xff] %v1286
  %s1295 = scalar_lea.vmem %s3, 48
  %v1296 = vld [vmem:[%s1295] sm:$0xff]
  %v1297 = vld [vmem:[%s1295 + $0xc] sm:$0xff]
  %v1298 = vld [vmem:[%s1295 + $0x18] sm:$0xff]
  %v1299 = vld [vmem:[%s1295 + $0x24] sm:$0xff]
  %v1300 = vld [vmem:[%s0] sm:$0xf]
  %v1301 = vld [vmem:[%s0 + $0x4] sm:$0xf]
  %v1302 = vld [vmem:[%s0 + $0x8] sm:$0xf]
  %v1303 = vld [vmem:[%s0 + $0xc] sm:$0xf]
  %v1308 = vunpack.c.l.b16 %v1300
  %v1309 = vunpack.c.l.b16 %v1301
  %v1310 = vunpack.c.l.b16 %v1302
  %v1311 = vunpack.c.l.b16 %v1303
  %v1312 = vpack.c.b16 %v1309, %v1308
  %v1313 = vpack.c.b16 %v1311, %v1310
  %v1318 = vunpack.c.l.b16 %v1296
  %v1319 = vunpack.c.h.b16 %v1296
  %v1320 = vunpack.c.l.b16 %v1297
  %v1321 = vunpack.c.h.b16 %v1297
  %v1322 = vunpack.c.l.b16 %v1298
  %v1323 = vunpack.c.h.b16 %v1298
  %v1324 = vunpack.c.l.b16 %v1299
  %v1325 = vunpack.c.h.b16 %v1299
  %v1326 = vpack.c.b16 %v1320, %v1318
  %v1327 = vpack.c.b16 %v1321, %v1319
  %v1328 = vpack.c.b16 %v1324, %v1322
  %v1329 = vpack.c.b16 %v1325, %v1323
  %v1335 = vsel %vm63, %v1312, 0
  %v1338 = vsel %vm63, %v1313, 0
  %1340 = vmatprep.subr.bf16.mxu0 %v1327
  %1341 = vmatpush1.bf16.msra.mxu0 %v1326
  %1342 = vmatprep.subr.bf16.mxu0 %v1329
  %1343 = vmatpush1.bf16.msra.mxu0 %v1328
  %1344 = vmatprep.subr.bf16.mxu0 0
  %1345 = vmatpush1.bf16.msra.mxu0 0
  %1346 = vmatprep.subr.bf16.mxu0 0
  %1347 = vmatpush1.bf16.msra.mxu0 0
  %1348 = vmatprep.subr.bf16.mxu0 0
  %1349 = vmatpush1.bf16.msra.mxu0 0
  %1350 = vmatprep.subr.bf16.mxu0 0
  %1351 = vmatpush1.bf16.msra.mxu0 0
  %1352 = vmatprep.subr.bf16.mxu0 0
  %1353 = vmatpush1.bf16.msra.mxu0 0
  %1354 = vmatprep.subr.bf16.mxu0 0
  %1355 = vmatpush1.bf16.msra.mxu0 0
  %1356 = vmatprep.subr.bf16.mxu0 0
  %1357 = vmatpush1.bf16.msra.mxu0 0
  %1358 = vmatprep.subr.bf16.mxu0 0
  %1359 = vmatpush1.bf16.msra.mxu0 0
  %1360 = vmatprep.subr.bf16.mxu0 0
  %1361 = vmatpush1.bf16.msra.mxu0 0
  %1362 = vmatprep.subr.bf16.mxu0 0
  %1363 = vmatpush1.bf16.msra.mxu0 0
  %1364 = vmatprep.subr.bf16.mxu0 0
  %1365 = vmatpush1.bf16.msra.mxu0 0
  %1366 = vmatprep.subr.bf16.mxu0 0
  %1367 = vmatpush1.bf16.msra.mxu0 0
  %1368 = vmatprep.subr.bf16.mxu0 0
  %1369 = vmatpush1.bf16.msra.mxu0 0
  %1370 = vmatprep.subr.bf16.mxu0 0
  %1371 = vmatpush1.bf16.msra.mxu0 0
  %1372 = vmatprep.mubr.bf16.mxu0 0
  %1373 = vmatmul.mubr.bf16.gmra.mrb[0].mxu0 %v1335
  %v1374 = vpop.f32.mrb[0].mxu0
  %v1375 = vadd.f32 0.0, %v1374
  %v1376 = vpop.f32.mrb[0].mxu0
  %v1377 = vadd.f32 0.0, %v1376
  %v1378 = vpop.f32.mrb[0].mxu0
  %v1379 = vadd.f32 0.0, %v1378
  %v1380 = vpop.f32.mrb[0].mxu0
  %v1381 = vadd.f32 0.0, %v1380
  %1382 = vmatprep.mubr.bf16.mxu0 0
  %1383 = vmatmul.mubr.bf16.gmra.mrb[0].mxu0 %v1338
  %v1384 = vpop.f32.mrb[0].mxu0
  %v1385 = vadd.f32 0.0, %v1384
  %v1386 = vpop.f32.mrb[0].mxu0
  %v1387 = vadd.f32 0.0, %v1386
  %v1388 = vpop.f32.mrb[0].mxu0
  %v1389 = vadd.f32 0.0, %v1388
  %v1390 = vpop.f32.mrb[0].mxu0
  %v1391 = vadd.f32 0.0, %v1390
  %1392 = vdwg.mxu0
  %v1393 = vmul.f32 %v1375, %v127
  %v1394 = vmul.f32 %v1377, %v131
  %v1395 = vmul.f32 %v1379, %v127
  %v1396 = vmul.f32 %v1381, %v131
  %v1397 = vmul.f32 %v1385, %v127
  %v1398 = vmul.f32 %v1387, %v131
  %v1399 = vmul.f32 %v1389, %v127
  %v1400 = vmul.f32 %v1391, %v131
  %v1401 = vld [vmem:[%s1295] sm:$0xff]
  %v1402 = vld [vmem:[%s1295 + $0x8] sm:$0xf]
  %v1403 = vld [vmem:[%s1295 + $0xc] sm:$0xff]
  %v1404 = vld [vmem:[%s1295 + $0x14] sm:$0xf]
  %v1405 = vld [vmem:[%s1295 + $0x18] sm:$0xff]
  %v1406 = vld [vmem:[%s1295 + $0x20] sm:$0xf]
  %v1407 = vld [vmem:[%s1295 + $0x24] sm:$0xff]
  %v1408 = vld [vmem:[%s1295 + $0x2c] sm:$0xf]
  %v1409 = vld [vmem:[%s150] sm:$0xf]
  %v1410 = vld [vmem:[%s150 + $0x4] sm:$0xf]
  %v1411 = vld [vmem:[%s150 + $0x8] sm:$0xf]
  %v1412 = vld [vmem:[%s150 + $0xc] sm:$0xf]
  %v1417 = vunpack.c.l.b16 %v1409
  %v1418 = vunpack.c.l.b16 %v1410
  %v1419 = vunpack.c.l.b16 %v1411
  %v1420 = vunpack.c.l.b16 %v1412
  %v1421 = vpack.c.b16 %v1418, %v1417
  %v1422 = vpack.c.b16 %v1420, %v1419
  %v1431 = vunpack.c.l.b16 %v1401
  %v1432 = vunpack.c.h.b16 %v1401
  %v1433 = vunpack.c.l.b16 %v1402
  %v1434 = vunpack.c.l.b16 %v1403
  %v1435 = vunpack.c.h.b16 %v1403
  %v1436 = vunpack.c.l.b16 %v1404
  %v1437 = vunpack.c.l.b16 %v1405
  %v1438 = vunpack.c.h.b16 %v1405
  %v1439 = vunpack.c.l.b16 %v1406
  %v1440 = vunpack.c.l.b16 %v1407
  %v1441 = vunpack.c.h.b16 %v1407
  %v1442 = vunpack.c.l.b16 %v1408
  %v1443 = vpack.c.b16 %v1434, %v1431
  %v1444 = vpack.c.b16 %v1435, %v1432
  %v1445 = vpack.c.b16 %v1436, %v1433
  %v1446 = vpack.c.b16 %v1440, %v1437
  %v1447 = vpack.c.b16 %v1441, %v1438
  %v1448 = vpack.c.b16 %v1442, %v1439
  %1449 = vrot.lane.b32.xlu0 %v1443, 127
  %v1450 = vpop.permute.xlu0 %1449
  %1451 = vrot.lane.b32.xlu0 %v1444, 127
  %v1452 = vpop.permute.xlu0 %1451
  %1453 = vrot.lane.b32.xlu0 %v1445, 127
  %v1454 = vpop.permute.xlu0 %1453
  %1455 = vrot.lane.b32.xlu0 %v1446, 127
  %v1456 = vpop.permute.xlu0 %1455
  %1457 = vrot.lane.b32.xlu0 %v1447, 127
  %v1458 = vpop.permute.xlu0 %1457
  %1459 = vrot.lane.b32.xlu0 %v1448, 127
  %v1460 = vpop.permute.xlu0 %1459
  %v1461 = vsel %vm203, %v1450, %v1452
  %v1462 = vsel %vm203, %v1452, %v1454
  %v1463 = vsel %vm203, %v1456, %v1458
  %v1464 = vsel %vm203, %v1458, %v1460
  %v1470 = vsel %vm63, %v1421, 0
  %v1473 = vsel %vm63, %v1422, 0
  %1475 = vmatprep.subr.bf16.mxu0 %v1462
  %1476 = vmatpush1.bf16.msra.mxu0 %v1461
  %1477 = vmatprep.subr.bf16.mxu0 %v1464
  %1478 = vmatpush1.bf16.msra.mxu0 %v1463
  %1479 = vmatprep.subr.bf16.mxu0 0
  %1480 = vmatpush1.bf16.msra.mxu0 0
  %1481 = vmatprep.subr.bf16.mxu0 0
  %1482 = vmatpush1.bf16.msra.mxu0 0
  %1483 = vmatprep.subr.bf16.mxu0 0
  %1484 = vmatpush1.bf16.msra.mxu0 0
  %1485 = vmatprep.subr.bf16.mxu0 0
  %1486 = vmatpush1.bf16.msra.mxu0 0
  %1487 = vmatprep.subr.bf16.mxu0 0
  %1488 = vmatpush1.bf16.msra.mxu0 0
  %1489 = vmatprep.subr.bf16.mxu0 0
  %1490 = vmatpush1.bf16.msra.mxu0 0
  %1491 = vmatprep.subr.bf16.mxu0 0
  %1492 = vmatpush1.bf16.msra.mxu0 0
  %1493 = vmatprep.subr.bf16.mxu0 0
  %1494 = vmatpush1.bf16.msra.mxu0 0
  %1495 = vmatprep.subr.bf16.mxu0 0
  %1496 = vmatpush1.bf16.msra.mxu0 0
  %1497 = vmatprep.subr.bf16.mxu0 0
  %1498 = vmatpush1.bf16.msra.mxu0 0
  %1499 = vmatprep.subr.bf16.mxu0 0
  %1500 = vmatpush1.bf16.msra.mxu0 0
  %1501 = vmatprep.subr.bf16.mxu0 0
  %1502 = vmatpush1.bf16.msra.mxu0 0
  %1503 = vmatprep.subr.bf16.mxu0 0
  %1504 = vmatpush1.bf16.msra.mxu0 0
  %1505 = vmatprep.subr.bf16.mxu0 0
  %1506 = vmatpush1.bf16.msra.mxu0 0
  %1507 = vmatprep.mubr.bf16.mxu0 0
  %1508 = vmatmul.mubr.bf16.gmra.mrb[0].mxu0 %v1470
  %v1509 = vpop.f32.mrb[0].mxu0
  %v1510 = vadd.f32 0.0, %v1509
  %v1511 = vpop.f32.mrb[0].mxu0
  %v1512 = vadd.f32 0.0, %v1511
  %v1513 = vpop.f32.mrb[0].mxu0
  %v1514 = vadd.f32 0.0, %v1513
  %v1515 = vpop.f32.mrb[0].mxu0
  %v1516 = vadd.f32 0.0, %v1515
  %1517 = vmatprep.mubr.bf16.mxu0 0
  %1518 = vmatmul.mubr.bf16.gmra.mrb[0].mxu0 %v1473
  %v1519 = vpop.f32.mrb[0].mxu0
  %v1520 = vadd.f32 0.0, %v1519
  %v1521 = vpop.f32.mrb[0].mxu0
  %v1522 = vadd.f32 0.0, %v1521
  %v1523 = vpop.f32.mrb[0].mxu0
  %v1524 = vadd.f32 0.0, %v1523
  %v1525 = vpop.f32.mrb[0].mxu0
  %v1526 = vadd.f32 0.0, %v1525
  %1527 = vdwg.mxu0
  %v1528 = vadd.f32 %v1393, %v1510
  %v1529 = vadd.f32 %v1394, %v1512
  %v1530 = vadd.f32 %v1395, %v1514
  %v1531 = vadd.f32 %v1396, %v1516
  %v1532 = vadd.f32 %v1397, %v1520
  %v1533 = vadd.f32 %v1398, %v1522
  %v1534 = vadd.f32 %v1399, %v1524
  %v1535 = vadd.f32 %v1400, %v1526
  %v1536 = vld [vmem:[%s279] sm:$0xf]
  %v1537 = vld [vmem:[%s279 + $0x4] sm:$0xf]
  %v1538 = vld [vmem:[%s279 + $0x8] sm:$0xf]
  %v1539 = vld [vmem:[%s279 + $0xc] sm:$0xf]
  %v1544 = vunpack.c.l.b16 %v1536
  %v1545 = vunpack.c.l.b16 %v1537
  %v1546 = vunpack.c.l.b16 %v1538
  %v1547 = vunpack.c.l.b16 %v1539
  %v1548 = vpack.c.b16 %v1545, %v1544
  %v1549 = vpack.c.b16 %v1547, %v1546
  %1550 = vrot.lane.b32.xlu0 %v1443, 126
  %v1551 = vpop.permute.xlu0 %1550
  %1552 = vrot.lane.b32.xlu0 %v1444, 126
  %v1553 = vpop.permute.xlu0 %1552
  %1554 = vrot.lane.b32.xlu0 %v1445, 126
  %v1555 = vpop.permute.xlu0 %1554
  %1556 = vrot.lane.b32.xlu0 %v1446, 126
  %v1557 = vpop.permute.xlu0 %1556
  %1558 = vrot.lane.b32.xlu0 %v1447, 126
  %v1559 = vpop.permute.xlu0 %1558
  %1560 = vrot.lane.b32.xlu0 %v1448, 126
  %v1561 = vpop.permute.xlu0 %1560
  %v1562 = vsel %vm306, %v1551, %v1553
  %v1563 = vsel %vm306, %v1553, %v1555
  %v1564 = vsel %vm306, %v1557, %v1559
  %v1565 = vsel %vm306, %v1559, %v1561
  %v1571 = vsel %vm63, %v1548, 0
  %v1574 = vsel %vm63, %v1549, 0
  %1576 = vmatprep.subr.bf16.mxu0 %v1563
  %1577 = vmatpush1.bf16.msra.mxu0 %v1562
  %1578 = vmatprep.subr.bf16.mxu0 %v1565
  %1579 = vmatpush1.bf16.msra.mxu0 %v1564
  %1580 = vmatprep.subr.bf16.mxu0 0
  %1581 = vmatpush1.bf16.msra.mxu0 0
  %1582 = vmatprep.subr.bf16.mxu0 0
  %1583 = vmatpush1.bf16.msra.mxu0 0
  %1584 = vmatprep.subr.bf16.mxu0 0
  %1585 = vmatpush1.bf16.msra.mxu0 0
  %1586 = vmatprep.subr.bf16.mxu0 0
  %1587 = vmatpush1.bf16.msra.mxu0 0
  %1588 = vmatprep.subr.bf16.mxu0 0
  %1589 = vmatpush1.bf16.msra.mxu0 0
  %1590 = vmatprep.subr.bf16.mxu0 0
  %1591 = vmatpush1.bf16.msra.mxu0 0
  %1592 = vmatprep.subr.bf16.mxu0 0
  %1593 = vmatpush1.bf16.msra.mxu0 0
  %1594 = vmatprep.subr.bf16.mxu0 0
  %1595 = vmatpush1.bf16.msra.mxu0 0
  %1596 = vmatprep.subr.bf16.mxu0 0
  %1597 = vmatpush1.bf16.msra.mxu0 0
  %1598 = vmatprep.subr.bf16.mxu0 0
  %1599 = vmatpush1.bf16.msra.mxu0 0
  %1600 = vmatprep.subr.bf16.mxu0 0
  %1601 = vmatpush1.bf16.msra.mxu0 0
  %1602 = vmatprep.subr.bf16.mxu0 0
  %1603 = vmatpush1.bf16.msra.mxu0 0
  %1604 = vmatprep.subr.bf16.mxu0 0
  %1605 = vmatpush1.bf16.msra.mxu0 0
  %1606 = vmatprep.subr.bf16.mxu0 0
  %1607 = vmatpush1.bf16.msra.mxu0 0
  %1608 = vmatprep.mubr.bf16.mxu0 0
  %1609 = vmatmul.mubr.bf16.gmra.mrb[0].mxu0 %v1571
  %v1610 = vpop.f32.mrb[0].mxu0
  %v1611 = vadd.f32 0.0, %v1610
  %v1612 = vpop.f32.mrb[0].mxu0
  %v1613 = vadd.f32 0.0, %v1612
  %v1614 = vpop.f32.mrb[0].mxu0
  %v1615 = vadd.f32 0.0, %v1614
  %v1616 = vpop.f32.mrb[0].mxu0
  %v1617 = vadd.f32 0.0, %v1616
  %1618 = vmatprep.mubr.bf16.mxu0 0
  %1619 = vmatmul.mubr.bf16.gmra.mrb[0].mxu0 %v1574
  %v1620 = vpop.f32.mrb[0].mxu0
  %v1621 = vadd.f32 0.0, %v1620
  %v1622 = vpop.f32.mrb[0].mxu0
  %v1623 = vadd.f32 0.0, %v1622
  %v1624 = vpop.f32.mrb[0].mxu0
  %v1625 = vadd.f32 0.0, %v1624
  %v1626 = vpop.f32.mrb[0].mxu0
  %v1627 = vadd.f32 0.0, %v1626
  %1628 = vdwg.mxu0
  %v1629 = vmul.f32 %v1611, %v378
  %v1630 = vmul.f32 %v1613, %v382
  %v1631 = vmul.f32 %v1615, %v378
  %v1632 = vmul.f32 %v1617, %v382
  %v1633 = vmul.f32 %v1621, %v378
  %v1634 = vmul.f32 %v1623, %v382
  %v1635 = vmul.f32 %v1625, %v378
  %v1636 = vmul.f32 %v1627, %v382
  %v1637 = vadd.f32 %v1528, %v1629
  %v1638 = vadd.f32 %v1529, %v1630
  %v1639 = vadd.f32 %v1530, %v1631
  %v1640 = vadd.f32 %v1531, %v1632
  %v1641 = vadd.f32 %v1532, %v1633
  %v1642 = vadd.f32 %v1533, %v1634
  %v1643 = vadd.f32 %v1534, %v1635
  %v1644 = vadd.f32 %v1535, %v1636
  %v1645 = vld [vmem:[%s401] sm:$0xf]
  %v1646 = vld [vmem:[%s401 + $0x4] sm:$0xf]
  %v1647 = vld [vmem:[%s401 + $0x8] sm:$0xf]
  %v1648 = vld [vmem:[%s401 + $0xc] sm:$0xf]
  %v1653 = vunpack.c.l.b16 %v1645
  %v1654 = vunpack.c.l.b16 %v1646
  %v1655 = vunpack.c.l.b16 %v1647
  %v1656 = vunpack.c.l.b16 %v1648
  %v1657 = vpack.c.b16 %v1654, %v1653
  %v1658 = vpack.c.b16 %v1656, %v1655
  %1659 = vrot.lane.b32.xlu0 %v1443, 112
  %v1660 = vpop.permute.xlu0 %1659
  %1661 = vrot.lane.b32.xlu0 %v1444, 112
  %v1662 = vpop.permute.xlu0 %1661
  %1663 = vrot.lane.b32.xlu0 %v1445, 112
  %v1664 = vpop.permute.xlu0 %1663
  %1665 = vrot.lane.b32.xlu0 %v1446, 112
  %v1666 = vpop.permute.xlu0 %1665
  %1667 = vrot.lane.b32.xlu0 %v1447, 112
  %v1668 = vpop.permute.xlu0 %1667
  %1669 = vrot.lane.b32.xlu0 %v1448, 112
  %v1670 = vpop.permute.xlu0 %1669
  %v1671 = vsel %vm428, %v1660, %v1662
  %v1672 = vsel %vm428, %v1662, %v1664
  %v1673 = vsel %vm428, %v1666, %v1668
  %v1674 = vsel %vm428, %v1668, %v1670
  %v1680 = vsel %vm63, %v1657, 0
  %v1683 = vsel %vm63, %v1658, 0
  %1685 = vmatprep.subr.bf16.mxu0 %v1672
  %1686 = vmatpush1.bf16.msra.mxu0 %v1671
  %1687 = vmatprep.subr.bf16.mxu0 %v1674
  %1688 = vmatpush1.bf16.msra.mxu0 %v1673
  %1689 = vmatprep.subr.bf16.mxu0 0
  %1690 = vmatpush1.bf16.msra.mxu0 0
  %1691 = vmatprep.subr.bf16.mxu0 0
  %1692 = vmatpush1.bf16.msra.mxu0 0
  %1693 = vmatprep.subr.bf16.mxu0 0
  %1694 = vmatpush1.bf16.msra.mxu0 0
  %1695 = vmatprep.subr.bf16.mxu0 0
  %1696 = vmatpush1.bf16.msra.mxu0 0
  %1697 = vmatprep.subr.bf16.mxu0 0
  %1698 = vmatpush1.bf16.msra.mxu0 0
  %1699 = vmatprep.subr.bf16.mxu0 0
  %1700 = vmatpush1.bf16.msra.mxu0 0
  %1701 = vmatprep.subr.bf16.mxu0 0
  %1702 = vmatpush1.bf16.msra.mxu0 0
  %1703 = vmatprep.subr.bf16.mxu0 0
  %1704 = vmatpush1.bf16.msra.mxu0 0
  %1705 = vmatprep.subr.bf16.mxu0 0
  %1706 = vmatpush1.bf16.msra.mxu0 0
  %1707 = vmatprep.subr.bf16.mxu0 0
  %1708 = vmatpush1.bf16.msra.mxu0 0
  %1709 = vmatprep.subr.bf16.mxu0 0
  %1710 = vmatpush1.bf16.msra.mxu0 0
  %1711 = vmatprep.subr.bf16.mxu0 0
  %1712 = vmatpush1.bf16.msra.mxu0 0
  %1713 = vmatprep.subr.bf16.mxu0 0
  %1714 = vmatpush1.bf16.msra.mxu0 0
  %1715 = vmatprep.subr.bf16.mxu0 0
  %1716 = vmatpush1.bf16.msra.mxu0 0
  %1717 = vmatprep.mubr.bf16.mxu0 0
  %1718 = vmatmul.mubr.bf16.gmra.mrb[0].mxu0 %v1680
  %v1719 = vpop.f32.mrb[0].mxu0
  %v1720 = vadd.f32 0.0, %v1719
  %v1721 = vpop.f32.mrb[0].mxu0
  %v1722 = vadd.f32 0.0, %v1721
  %v1723 = vpop.f32.mrb[0].mxu0
  %v1724 = vadd.f32 0.0, %v1723
  %v1725 = vpop.f32.mrb[0].mxu0
  %v1726 = vadd.f32 0.0, %v1725
  %1727 = vmatprep.mubr.bf16.mxu0 0
  %1728 = vmatmul.mubr.bf16.gmra.mrb[0].mxu0 %v1683
  %v1729 = vpop.f32.mrb[0].mxu0
  %v1730 = vadd.f32 0.0, %v1729
  %v1731 = vpop.f32.mrb[0].mxu0
  %v1732 = vadd.f32 0.0, %v1731
  %v1733 = vpop.f32.mrb[0].mxu0
  %v1734 = vadd.f32 0.0, %v1733
  %v1735 = vpop.f32.mrb[0].mxu0
  %v1736 = vadd.f32 0.0, %v1735
  %1737 = vdwg.mxu0
  %v1738 = vmul.f32 %v1720, %v127
  %v1739 = vmul.f32 %v1722, %v131
  %v1740 = vmul.f32 %v1724, %v127
  %v1741 = vmul.f32 %v1726, %v131
  %v1742 = vmul.f32 %v1730, %v127
  %v1743 = vmul.f32 %v1732, %v131
  %v1744 = vmul.f32 %v1734, %v127
  %v1745 = vmul.f32 %v1736, %v131
  %v1746 = vadd.f32 %v1637, %v1738
  %v1747 = vadd.f32 %v1638, %v1739
  %v1748 = vadd.f32 %v1639, %v1740
  %v1749 = vadd.f32 %v1640, %v1741
  %v1750 = vadd.f32 %v1641, %v1742
  %v1751 = vadd.f32 %v1642, %v1743
  %v1752 = vadd.f32 %v1643, %v1744
  %v1753 = vadd.f32 %v1644, %v1745
  %v1754 = vld [vmem:[%s512] sm:$0xf]
  %v1755 = vld [vmem:[%s512 + $0x4] sm:$0xf]
  %v1756 = vld [vmem:[%s512 + $0x8] sm:$0xf]
  %v1757 = vld [vmem:[%s512 + $0xc] sm:$0xf]
  %v1762 = vunpack.c.l.b16 %v1754
  %v1763 = vunpack.c.l.b16 %v1755
  %v1764 = vunpack.c.l.b16 %v1756
  %v1765 = vunpack.c.l.b16 %v1757
  %v1766 = vpack.c.b16 %v1763, %v1762
  %v1767 = vpack.c.b16 %v1765, %v1764
  %1768 = vrot.lane.b32.xlu0 %v1443, 111
  %v1769 = vpop.permute.xlu0 %1768
  %1770 = vrot.lane.b32.xlu0 %v1444, 111
  %v1771 = vpop.permute.xlu0 %1770
  %1772 = vrot.lane.b32.xlu0 %v1445, 111
  %v1773 = vpop.permute.xlu0 %1772
  %1774 = vrot.lane.b32.xlu0 %v1446, 111
  %v1775 = vpop.permute.xlu0 %1774
  %1776 = vrot.lane.b32.xlu0 %v1447, 111
  %v1777 = vpop.permute.xlu0 %1776
  %1778 = vrot.lane.b32.xlu0 %v1448, 111
  %v1779 = vpop.permute.xlu0 %1778
  %v1780 = vsel %vm539, %v1769, %v1771
  %v1781 = vsel %vm539, %v1771, %v1773
  %v1782 = vsel %vm539, %v1775, %v1777
  %v1783 = vsel %vm539, %v1777, %v1779
  %v1789 = vsel %vm63, %v1766, 0
  %v1792 = vsel %vm63, %v1767, 0
  %1794 = vmatprep.subr.bf16.mxu0 %v1781
  %1795 = vmatpush1.bf16.msra.mxu0 %v1780
  %1796 = vmatprep.subr.bf16.mxu0 %v1783
  %1797 = vmatpush1.bf16.msra.mxu0 %v1782
  %1798 = vmatprep.subr.bf16.mxu0 0
  %1799 = vmatpush1.bf16.msra.mxu0 0
  %1800 = vmatprep.subr.bf16.mxu0 0
  %1801 = vmatpush1.bf16.msra.mxu0 0
  %1802 = vmatprep.subr.bf16.mxu0 0
  %1803 = vmatpush1.bf16.msra.mxu0 0
  %1804 = vmatprep.subr.bf16.mxu0 0
  %1805 = vmatpush1.bf16.msra.mxu0 0
  %1806 = vmatprep.subr.bf16.mxu0 0
  %1807 = vmatpush1.bf16.msra.mxu0 0
  %1808 = vmatprep.subr.bf16.mxu0 0
  %1809 = vmatpush1.bf16.msra.mxu0 0
  %1810 = vmatprep.subr.bf16.mxu0 0
  %1811 = vmatpush1.bf16.msra.mxu0 0
  %1812 = vmatprep.subr.bf16.mxu0 0
  %1813 = vmatpush1.bf16.msra.mxu0 0
  %1814 = vmatprep.subr.bf16.mxu0 0
  %1815 = vmatpush1.bf16.msra.mxu0 0
  %1816 = vmatprep.subr.bf16.mxu0 0
  %1817 = vmatpush1.bf16.msra.mxu0 0
  %1818 = vmatprep.subr.bf16.mxu0 0
  %1819 = vmatpush1.bf16.msra.mxu0 0
  %1820 = vmatprep.subr.bf16.mxu0 0
  %1821 = vmatpush1.bf16.msra.mxu0 0
  %1822 = vmatprep.subr.bf16.mxu0 0
  %1823 = vmatpush1.bf16.msra.mxu0 0
  %1824 = vmatprep.subr.bf16.mxu0 0
  %1825 = vmatpush1.bf16.msra.mxu0 0
  %1826 = vmatprep.mubr.bf16.mxu0 0
  %1827 = vmatmul.mubr.bf16.gmra.mrb[0].mxu0 %v1789
  %v1828 = vpop.f32.mrb[0].mxu0
  %v1829 = vadd.f32 0.0, %v1828
  %v1830 = vpop.f32.mrb[0].mxu0
  %v1831 = vadd.f32 0.0, %v1830
  %v1832 = vpop.f32.mrb[0].mxu0
  %v1833 = vadd.f32 0.0, %v1832
  %v1834 = vpop.f32.mrb[0].mxu0
  %v1835 = vadd.f32 0.0, %v1834
  %1836 = vmatprep.mubr.bf16.mxu0 0
  %1837 = vmatmul.mubr.bf16.gmra.mrb[0].mxu0 %v1792
  %v1838 = vpop.f32.mrb[0].mxu0
  %v1839 = vadd.f32 0.0, %v1838
  %v1840 = vpop.f32.mrb[0].mxu0
  %v1841 = vadd.f32 0.0, %v1840
  %v1842 = vpop.f32.mrb[0].mxu0
  %v1843 = vadd.f32 0.0, %v1842
  %v1844 = vpop.f32.mrb[0].mxu0
  %v1845 = vadd.f32 0.0, %v1844
  %1846 = vdwg.mxu0
  %v1847 = vadd.f32 %v1746, %v1829
  %v1848 = vadd.f32 %v1747, %v1831
  %v1849 = vadd.f32 %v1748, %v1833
  %v1850 = vadd.f32 %v1749, %v1835
  %v1851 = vadd.f32 %v1750, %v1839
  %v1852 = vadd.f32 %v1751, %v1841
  %v1853 = vadd.f32 %v1752, %v1843
  %v1854 = vadd.f32 %v1753, %v1845
  %v1855 = vld [vmem:[%s615] sm:$0xf]
  %v1856 = vld [vmem:[%s615 + $0x4] sm:$0xf]
  %v1857 = vld [vmem:[%s615 + $0x8] sm:$0xf]
  %v1858 = vld [vmem:[%s615 + $0xc] sm:$0xf]
  %v1863 = vunpack.c.l.b16 %v1855
  %v1864 = vunpack.c.l.b16 %v1856
  %v1865 = vunpack.c.l.b16 %v1857
  %v1866 = vunpack.c.l.b16 %v1858
  %v1867 = vpack.c.b16 %v1864, %v1863
  %v1868 = vpack.c.b16 %v1866, %v1865
  %1869 = vrot.lane.b32.xlu0 %v1443, 110
  %v1870 = vpop.permute.xlu0 %1869
  %1871 = vrot.lane.b32.xlu0 %v1444, 110
  %v1872 = vpop.permute.xlu0 %1871
  %1873 = vrot.lane.b32.xlu0 %v1445, 110
  %v1874 = vpop.permute.xlu0 %1873
  %1875 = vrot.lane.b32.xlu0 %v1446, 110
  %v1876 = vpop.permute.xlu0 %1875
  %1877 = vrot.lane.b32.xlu0 %v1447, 110
  %v1878 = vpop.permute.xlu0 %1877
  %1879 = vrot.lane.b32.xlu0 %v1448, 110
  %v1880 = vpop.permute.xlu0 %1879
  %v1881 = vsel %vm642, %v1870, %v1872
  %v1882 = vsel %vm642, %v1872, %v1874
  %v1883 = vsel %vm642, %v1876, %v1878
  %v1884 = vsel %vm642, %v1878, %v1880
  %v1890 = vsel %vm63, %v1867, 0
  %v1893 = vsel %vm63, %v1868, 0
  %1895 = vmatprep.subr.bf16.mxu0 %v1882
  %1896 = vmatpush1.bf16.msra.mxu0 %v1881
  %1897 = vmatprep.subr.bf16.mxu0 %v1884
  %1898 = vmatpush1.bf16.msra.mxu0 %v1883
  %1899 = vmatprep.subr.bf16.mxu0 0
  %1900 = vmatpush1.bf16.msra.mxu0 0
  %1901 = vmatprep.subr.bf16.mxu0 0
  %1902 = vmatpush1.bf16.msra.mxu0 0
  %1903 = vmatprep.subr.bf16.mxu0 0
  %1904 = vmatpush1.bf16.msra.mxu0 0
  %1905 = vmatprep.subr.bf16.mxu0 0
  %1906 = vmatpush1.bf16.msra.mxu0 0
  %1907 = vmatprep.subr.bf16.mxu0 0
  %1908 = vmatpush1.bf16.msra.mxu0 0
  %1909 = vmatprep.subr.bf16.mxu0 0
  %1910 = vmatpush1.bf16.msra.mxu0 0
  %1911 = vmatprep.subr.bf16.mxu0 0
  %1912 = vmatpush1.bf16.msra.mxu0 0
  %1913 = vmatprep.subr.bf16.mxu0 0
  %1914 = vmatpush1.bf16.msra.mxu0 0
  %1915 = vmatprep.subr.bf16.mxu0 0
  %1916 = vmatpush1.bf16.msra.mxu0 0
  %1917 = vmatprep.subr.bf16.mxu0 0
  %1918 = vmatpush1.bf16.msra.mxu0 0
  %1919 = vmatprep.subr.bf16.mxu0 0
  %1920 = vmatpush1.bf16.msra.mxu0 0
  %1921 = vmatprep.subr.bf16.mxu0 0
  %1922 = vmatpush1.bf16.msra.mxu0 0
  %1923 = vmatprep.subr.bf16.mxu0 0
  %1924 = vmatpush1.bf16.msra.mxu0 0
  %1925 = vmatprep.subr.bf16.mxu0 0
  %1926 = vmatpush1.bf16.msra.mxu0 0
  %1927 = vmatprep.mubr.bf16.mxu0 0
  %1928 = vmatmul.mubr.bf16.gmra.mrb[0].mxu0 %v1890
  %v1929 = vpop.f32.mrb[0].mxu0
  %v1930 = vadd.f32 0.0, %v1929
  %v1931 = vpop.f32.mrb[0].mxu0
  %v1932 = vadd.f32 0.0, %v1931
  %v1933 = vpop.f32.mrb[0].mxu0
  %v1934 = vadd.f32 0.0, %v1933
  %v1935 = vpop.f32.mrb[0].mxu0
  %v1936 = vadd.f32 0.0, %v1935
  %1937 = vmatprep.mubr.bf16.mxu0 0
  %1938 = vmatmul.mubr.bf16.gmra.mrb[0].mxu0 %v1893
  %v1939 = vpop.f32.mrb[0].mxu0
  %v1940 = vadd.f32 0.0, %v1939
  %v1941 = vpop.f32.mrb[0].mxu0
  %v1942 = vadd.f32 0.0, %v1941
  %v1943 = vpop.f32.mrb[0].mxu0
  %v1944 = vadd.f32 0.0, %v1943
  %v1945 = vpop.f32.mrb[0].mxu0
  %v1946 = vadd.f32 0.0, %v1945
  %1947 = vdwg.mxu0
  %v1948 = vmul.f32 %v1930, %v378
  %v1949 = vmul.f32 %v1932, %v382
  %v1950 = vmul.f32 %v1934, %v378
  %v1951 = vmul.f32 %v1936, %v382
  %v1952 = vmul.f32 %v1940, %v378
  %v1953 = vmul.f32 %v1942, %v382
  %v1954 = vmul.f32 %v1944, %v378
  %v1955 = vmul.f32 %v1946, %v382
  %v1956 = vadd.f32 %v1847, %v1948
  %v1957 = vadd.f32 %v1848, %v1949
  %v1958 = vadd.f32 %v1849, %v1950
  %v1959 = vadd.f32 %v1850, %v1951
  %v1960 = vadd.f32 %v1851, %v1952
  %v1961 = vadd.f32 %v1852, %v1953
  %v1962 = vadd.f32 %v1853, %v1954
  %v1963 = vadd.f32 %v1854, %v1955
  %v1964 = vld [vmem:[%s726] sm:$0xf]
  %v1965 = vld [vmem:[%s726 + $0x4] sm:$0xf]
  %v1966 = vld [vmem:[%s726 + $0x8] sm:$0xf]
  %v1967 = vld [vmem:[%s726 + $0xc] sm:$0xf]
  %v1972 = vunpack.c.l.b16 %v1964
  %v1973 = vunpack.c.l.b16 %v1965
  %v1974 = vunpack.c.l.b16 %v1966
  %v1975 = vunpack.c.l.b16 %v1967
  %v1976 = vpack.c.b16 %v1973, %v1972
  %v1977 = vpack.c.b16 %v1975, %v1974
  %1978 = vrot.lane.b32.xlu0 %v1443, 96
  %v1979 = vpop.permute.xlu0 %1978
  %1980 = vrot.lane.b32.xlu0 %v1444, 96
  %v1981 = vpop.permute.xlu0 %1980
  %1982 = vrot.lane.b32.xlu0 %v1445, 96
  %v1983 = vpop.permute.xlu0 %1982
  %1984 = vrot.lane.b32.xlu0 %v1446, 96
  %v1985 = vpop.permute.xlu0 %1984
  %1986 = vrot.lane.b32.xlu0 %v1447, 96
  %v1987 = vpop.permute.xlu0 %1986
  %1988 = vrot.lane.b32.xlu0 %v1448, 96
  %v1989 = vpop.permute.xlu0 %1988
  %v1990 = vsel %vm753, %v1979, %v1981
  %v1991 = vsel %vm753, %v1981, %v1983
  %v1992 = vsel %vm753, %v1985, %v1987
  %v1993 = vsel %vm753, %v1987, %v1989
  %v1999 = vsel %vm63, %v1976, 0
  %v2002 = vsel %vm63, %v1977, 0
  %2004 = vmatprep.subr.bf16.mxu0 %v1991
  %2005 = vmatpush1.bf16.msra.mxu0 %v1990
  %2006 = vmatprep.subr.bf16.mxu0 %v1993
  %2007 = vmatpush1.bf16.msra.mxu0 %v1992
  %2008 = vmatprep.subr.bf16.mxu0 0
  %2009 = vmatpush1.bf16.msra.mxu0 0
  %2010 = vmatprep.subr.bf16.mxu0 0
  %2011 = vmatpush1.bf16.msra.mxu0 0
  %2012 = vmatprep.subr.bf16.mxu0 0
  %2013 = vmatpush1.bf16.msra.mxu0 0
  %2014 = vmatprep.subr.bf16.mxu0 0
  %2015 = vmatpush1.bf16.msra.mxu0 0
  %2016 = vmatprep.subr.bf16.mxu0 0
  %2017 = vmatpush1.bf16.msra.mxu0 0
  %2018 = vmatprep.subr.bf16.mxu0 0
  %2019 = vmatpush1.bf16.msra.mxu0 0
  %2020 = vmatprep.subr.bf16.mxu0 0
  %2021 = vmatpush1.bf16.msra.mxu0 0
  %2022 = vmatprep.subr.bf16.mxu0 0
  %2023 = vmatpush1.bf16.msra.mxu0 0
  %2024 = vmatprep.subr.bf16.mxu0 0
  %2025 = vmatpush1.bf16.msra.mxu0 0
  %2026 = vmatprep.subr.bf16.mxu0 0
  %2027 = vmatpush1.bf16.msra.mxu0 0
  %2028 = vmatprep.subr.bf16.mxu0 0
  %2029 = vmatpush1.bf16.msra.mxu0 0
  %2030 = vmatprep.subr.bf16.mxu0 0
  %2031 = vmatpush1.bf16.msra.mxu0 0
  %2032 = vmatprep.subr.bf16.mxu0 0
  %2033 = vmatpush1.bf16.msra.mxu0 0
  %2034 = vmatprep.subr.bf16.mxu0 0
  %2035 = vmatpush1.bf16.msra.mxu0 0
  %2036 = vmatprep.mubr.bf16.mxu0 0
  %2037 = vmatmul.mubr.bf16.gmra.mrb[0].mxu0 %v1999
  %v2038 = vpop.f32.mrb[0].mxu0
  %v2039 = vadd.f32 0.0, %v2038
  %v2040 = vpop.f32.mrb[0].mxu0
  %v2041 = vadd.f32 0.0, %v2040
  %v2042 = vpop.f32.mrb[0].mxu0
  %v2043 = vadd.f32 0.0, %v2042
  %v2044 = vpop.f32.mrb[0].mxu0
  %v2045 = vadd.f32 0.0, %v2044
  %2046 = vmatprep.mubr.bf16.mxu0 0
  %2047 = vmatmul.mubr.bf16.gmra.mrb[0].mxu0 %v2002
  %v2048 = vpop.f32.mrb[0].mxu0
  %v2049 = vadd.f32 0.0, %v2048
  %v2050 = vpop.f32.mrb[0].mxu0
  %v2051 = vadd.f32 0.0, %v2050
  %v2052 = vpop.f32.mrb[0].mxu0
  %v2053 = vadd.f32 0.0, %v2052
  %v2054 = vpop.f32.mrb[0].mxu0
  %v2055 = vadd.f32 0.0, %v2054
  %2056 = vdwg.mxu0
  %v2057 = vmul.f32 %v2039, %v127
  %v2058 = vmul.f32 %v2041, %v131
  %v2059 = vmul.f32 %v2043, %v127
  %v2060 = vmul.f32 %v2045, %v131
  %v2061 = vmul.f32 %v2049, %v127
  %v2062 = vmul.f32 %v2051, %v131
  %v2063 = vmul.f32 %v2053, %v127
  %v2064 = vmul.f32 %v2055, %v131
  %v2065 = vadd.f32 %v1956, %v2057
  %v2066 = vadd.f32 %v1957, %v2058
  %v2067 = vadd.f32 %v1958, %v2059
  %v2068 = vadd.f32 %v1959, %v2060
  %v2069 = vadd.f32 %v1960, %v2061
  %v2070 = vadd.f32 %v1961, %v2062
  %v2071 = vadd.f32 %v1962, %v2063
  %v2072 = vadd.f32 %v1963, %v2064
  %v2073 = vld [vmem:[%s837] sm:$0xf]
  %v2074 = vld [vmem:[%s837 + $0x4] sm:$0xf]
  %v2075 = vld [vmem:[%s837 + $0x8] sm:$0xf]
  %v2076 = vld [vmem:[%s837 + $0xc] sm:$0xf]
  %v2081 = vunpack.c.l.b16 %v2073
  %v2082 = vunpack.c.l.b16 %v2074
  %v2083 = vunpack.c.l.b16 %v2075
  %v2084 = vunpack.c.l.b16 %v2076
  %v2085 = vpack.c.b16 %v2082, %v2081
  %v2086 = vpack.c.b16 %v2084, %v2083
  %2087 = vrot.lane.b32.xlu0 %v1443, 95
  %v2088 = vpop.permute.xlu0 %2087
  %2089 = vrot.lane.b32.xlu0 %v1444, 95
  %v2090 = vpop.permute.xlu0 %2089
  %2091 = vrot.lane.b32.xlu0 %v1445, 95
  %v2092 = vpop.permute.xlu0 %2091
  %2093 = vrot.lane.b32.xlu0 %v1446, 95
  %v2094 = vpop.permute.xlu0 %2093
  %2095 = vrot.lane.b32.xlu0 %v1447, 95
  %v2096 = vpop.permute.xlu0 %2095
  %2097 = vrot.lane.b32.xlu0 %v1448, 95
  %v2098 = vpop.permute.xlu0 %2097
  %v2099 = vsel %vm864, %v2088, %v2090
  %v2100 = vsel %vm864, %v2090, %v2092
  %v2101 = vsel %vm864, %v2094, %v2096
  %v2102 = vsel %vm864, %v2096, %v2098
  %v2108 = vsel %vm63, %v2085, 0
  %v2111 = vsel %vm63, %v2086, 0
  %2113 = vmatprep.subr.bf16.mxu0 %v2100
  %2114 = vmatpush1.bf16.msra.mxu0 %v2099
  %2115 = vmatprep.subr.bf16.mxu0 %v2102
  %2116 = vmatpush1.bf16.msra.mxu0 %v2101
  %2117 = vmatprep.subr.bf16.mxu0 0
  %2118 = vmatpush1.bf16.msra.mxu0 0
  %2119 = vmatprep.subr.bf16.mxu0 0
  %2120 = vmatpush1.bf16.msra.mxu0 0
  %2121 = vmatprep.subr.bf16.mxu0 0
  %2122 = vmatpush1.bf16.msra.mxu0 0
  %2123 = vmatprep.subr.bf16.mxu0 0
  %2124 = vmatpush1.bf16.msra.mxu0 0
  %2125 = vmatprep.subr.bf16.mxu0 0
  %2126 = vmatpush1.bf16.msra.mxu0 0
  %2127 = vmatprep.subr.bf16.mxu0 0
  %2128 = vmatpush1.bf16.msra.mxu0 0
  %2129 = vmatprep.subr.bf16.mxu0 0
  %2130 = vmatpush1.bf16.msra.mxu0 0
  %2131 = vmatprep.subr.bf16.mxu0 0
  %2132 = vmatpush1.bf16.msra.mxu0 0
  %2133 = vmatprep.subr.bf16.mxu0 0
  %2134 = vmatpush1.bf16.msra.mxu0 0
  %2135 = vmatprep.subr.bf16.mxu0 0
  %2136 = vmatpush1.bf16.msra.mxu0 0
  %2137 = vmatprep.subr.bf16.mxu0 0
  %2138 = vmatpush1.bf16.msra.mxu0 0
  %2139 = vmatprep.subr.bf16.mxu0 0
  %2140 = vmatpush1.bf16.msra.mxu0 0
  %2141 = vmatprep.subr.bf16.mxu0 0
  %2142 = vmatpush1.bf16.msra.mxu0 0
  %2143 = vmatprep.subr.bf16.mxu0 0
  %2144 = vmatpush1.bf16.msra.mxu0 0
  %2145 = vmatprep.mubr.bf16.mxu0 0
  %2146 = vmatmul.mubr.bf16.gmra.mrb[0].mxu0 %v2108
  %v2147 = vpop.f32.mrb[0].mxu0
  %v2148 = vadd.f32 0.0, %v2147
  %v2149 = vpop.f32.mrb[0].mxu0
  %v2150 = vadd.f32 0.0, %v2149
  %v2151 = vpop.f32.mrb[0].mxu0
  %v2152 = vadd.f32 0.0, %v2151
  %v2153 = vpop.f32.mrb[0].mxu0
  %v2154 = vadd.f32 0.0, %v2153
  %2155 = vmatprep.mubr.bf16.mxu0 0
  %2156 = vmatmul.mubr.bf16.gmra.mrb[0].mxu0 %v2111
  %v2157 = vpop.f32.mrb[0].mxu0
  %v2158 = vadd.f32 0.0, %v2157
  %v2159 = vpop.f32.mrb[0].mxu0
  %v2160 = vadd.f32 0.0, %v2159
  %v2161 = vpop.f32.mrb[0].mxu0
  %v2162 = vadd.f32 0.0, %v2161
  %v2163 = vpop.f32.mrb[0].mxu0
  %v2164 = vadd.f32 0.0, %v2163
  %2165 = vdwg.mxu0
  %v2166 = vadd.f32 %v2065, %v2148
  %v2167 = vadd.f32 %v2066, %v2150
  %v2168 = vadd.f32 %v2067, %v2152
  %v2169 = vadd.f32 %v2068, %v2154
  %v2170 = vadd.f32 %v2069, %v2158
  %v2171 = vadd.f32 %v2070, %v2160
  %v2172 = vadd.f32 %v2071, %v2162
  %v2173 = vadd.f32 %v2072, %v2164
  %v2174 = vld [vmem:[%s940] sm:$0xf]
  %v2175 = vld [vmem:[%s940 + $0x4] sm:$0xf]
  %v2176 = vld [vmem:[%s940 + $0x8] sm:$0xf]
  %v2177 = vld [vmem:[%s940 + $0xc] sm:$0xf]
  %v2182 = vunpack.c.l.b16 %v2174
  %v2183 = vunpack.c.l.b16 %v2175
  %v2184 = vunpack.c.l.b16 %v2176
  %v2185 = vunpack.c.l.b16 %v2177
  %v2186 = vpack.c.b16 %v2183, %v2182
  %v2187 = vpack.c.b16 %v2185, %v2184
  %2188 = vrot.lane.b32.xlu0 %v1443, 94
  %v2189 = vpop.permute.xlu0 %2188
  %2190 = vrot.lane.b32.xlu0 %v1444, 94
  %v2191 = vpop.permute.xlu0 %2190
  %2192 = vrot.lane.b32.xlu0 %v1445, 94
  %v2193 = vpop.permute.xlu0 %2192
  %2194 = vrot.lane.b32.xlu0 %v1446, 94
  %v2195 = vpop.permute.xlu0 %2194
  %2196 = vrot.lane.b32.xlu0 %v1447, 94
  %v2197 = vpop.permute.xlu0 %2196
  %2198 = vrot.lane.b32.xlu0 %v1448, 94
  %v2199 = vpop.permute.xlu0 %2198
  %v2200 = vsel %vm967, %v2189, %v2191
  %v2201 = vsel %vm967, %v2191, %v2193
  %v2202 = vsel %vm967, %v2195, %v2197
  %v2203 = vsel %vm967, %v2197, %v2199
  %v2209 = vsel %vm63, %v2186, 0
  %v2212 = vsel %vm63, %v2187, 0
  %2214 = vmatprep.subr.bf16.mxu0 %v2201
  %2215 = vmatpush1.bf16.msra.mxu0 %v2200
  %2216 = vmatprep.subr.bf16.mxu0 %v2203
  %2217 = vmatpush1.bf16.msra.mxu0 %v2202
  %2218 = vmatprep.subr.bf16.mxu0 0
  %2219 = vmatpush1.bf16.msra.mxu0 0
  %2220 = vmatprep.subr.bf16.mxu0 0
  %2221 = vmatpush1.bf16.msra.mxu0 0
  %2222 = vmatprep.subr.bf16.mxu0 0
  %2223 = vmatpush1.bf16.msra.mxu0 0
  %2224 = vmatprep.subr.bf16.mxu0 0
  %2225 = vmatpush1.bf16.msra.mxu0 0
  %2226 = vmatprep.subr.bf16.mxu0 0
  %2227 = vmatpush1.bf16.msra.mxu0 0
  %2228 = vmatprep.subr.bf16.mxu0 0
  %2229 = vmatpush1.bf16.msra.mxu0 0
  %2230 = vmatprep.subr.bf16.mxu0 0
  %2231 = vmatpush1.bf16.msra.mxu0 0
  %2232 = vmatprep.subr.bf16.mxu0 0
  %2233 = vmatpush1.bf16.msra.mxu0 0
  %2234 = vmatprep.subr.bf16.mxu0 0
  %2235 = vmatpush1.bf16.msra.mxu0 0
  %2236 = vmatprep.subr.bf16.mxu0 0
  %2237 = vmatpush1.bf16.msra.mxu0 0
  %2238 = vmatprep.subr.bf16.mxu0 0
  %2239 = vmatpush1.bf16.msra.mxu0 0
  %2240 = vmatprep.subr.bf16.mxu0 0
  %2241 = vmatpush1.bf16.msra.mxu0 0
  %2242 = vmatprep.subr.bf16.mxu0 0
  %2243 = vmatpush1.bf16.msra.mxu0 0
  %2244 = vmatprep.subr.bf16.mxu0 0
  %2245 = vmatpush1.bf16.msra.mxu0 0
  %2246 = vmatprep.mubr.bf16.mxu0 0
  %2247 = vmatmul.mubr.bf16.gmra.mrb[0].mxu0 %v2209
  %v2248 = vpop.f32.mrb[0].mxu0
  %v2249 = vadd.f32 0.0, %v2248
  %v2250 = vpop.f32.mrb[0].mxu0
  %v2251 = vadd.f32 0.0, %v2250
  %v2252 = vpop.f32.mrb[0].mxu0
  %v2253 = vadd.f32 0.0, %v2252
  %v2254 = vpop.f32.mrb[0].mxu0
  %v2255 = vadd.f32 0.0, %v2254
  %2256 = vmatprep.mubr.bf16.mxu0 0
  %2257 = vmatmul.mubr.bf16.gmra.mrb[0].mxu0 %v2212
  %v2258 = vpop.f32.mrb[0].mxu0
  %v2259 = vadd.f32 0.0, %v2258
  %v2260 = vpop.f32.mrb[0].mxu0
  %v2261 = vadd.f32 0.0, %v2260
  %v2262 = vpop.f32.mrb[0].mxu0
  %v2263 = vadd.f32 0.0, %v2262
  %v2264 = vpop.f32.mrb[0].mxu0
  %v2265 = vadd.f32 0.0, %v2264
  %2266 = vdwg.mxu0
  %v2267 = vmul.f32 %v2249, %v378
  %v2268 = vmul.f32 %v2251, %v382
  %v2269 = vmul.f32 %v2253, %v378
  %v2270 = vmul.f32 %v2255, %v382
  %v2271 = vmul.f32 %v2259, %v378
  %v2272 = vmul.f32 %v2261, %v382
  %v2273 = vmul.f32 %v2263, %v378
  %v2274 = vmul.f32 %v2265, %v382
  %v2275 = vadd.f32 %v2166, %v2267
  %v2276 = vadd.f32 %v2167, %v2268
  %v2277 = vadd.f32 %v2168, %v2269
  %v2278 = vadd.f32 %v2169, %v2270
  %v2279 = vadd.f32 %v2170, %v2271
  %v2280 = vadd.f32 %v2171, %v2272
  %v2281 = vadd.f32 %v2172, %v2273
  %v2282 = vadd.f32 %v2173, %v2274
  %v2283 = vadd.f32 %v2275, %v1054
  %v2284 = vadd.f32 %v2276, %v1054
  %v2285 = vadd.f32 %v2277, %v1059
  %v2286 = vadd.f32 %v2278, %v1059
  %v2287 = vadd.f32 %v2279, %v1064
  %v2288 = vadd.f32 %v2280, %v1064
  %v2289 = vadd.f32 %v2281, %v1069
  %v2290 = vadd.f32 %v2282, %v1069
  %v2291 = vmul.f32 %v2283, 0.5
  %v2292 = vmul.f32 %v2284, 0.5
  %v2293 = vmul.f32 %v2285, 0.5
  %v2294 = vmul.f32 %v2286, 0.5
  %v2295 = vmul.f32 %v2287, 0.5
  %v2296 = vmul.f32 %v2288, 0.5
  %v2297 = vmul.f32 %v2289, 0.5
  %v2298 = vmul.f32 %v2290, 0.5
  %v2299 = vmul.f32 %v2283, 0.70710677
  %v2300 = vmul.f32 %v2284, 0.70710677
  %v2301 = vmul.f32 %v2285, 0.70710677
  %v2302 = vmul.f32 %v2286, 0.70710677
  %v2303 = vmul.f32 %v2287, 0.70710677
  %v2304 = vmul.f32 %v2288, 0.70710677
  %v2305 = vmul.f32 %v2289, 0.70710677
  %v2306 = vmul.f32 %v2290, 0.70710677
  %v2307 = vand.u32 2147483647, %v2299
  %v2308 = vand.u32 2147483647, %v2300
  %v2309 = vand.u32 2147483647, %v2301
  %v2310 = vand.u32 2147483647, %v2302
  %v2311 = vand.u32 2147483647, %v2303
  %v2312 = vand.u32 2147483647, %v2304
  %v2313 = vand.u32 2147483647, %v2305
  %v2314 = vand.u32 2147483647, %v2306
  %v2315 = vmul.f32 %v2307, 0.3275911
  %v2316 = vmul.f32 %v2308, 0.3275911
  %v2317 = vmul.f32 %v2309, 0.3275911
  %v2318 = vmul.f32 %v2310, 0.3275911
  %v2319 = vmul.f32 %v2311, 0.3275911
  %v2320 = vmul.f32 %v2312, 0.3275911
  %v2321 = vmul.f32 %v2313, 0.3275911
  %v2322 = vmul.f32 %v2314, 0.3275911
  %v2323 = vadd.f32 %v2315, 1.0
  %v2324 = vadd.f32 %v2316, 1.0
  %v2325 = vadd.f32 %v2317, 1.0
  %v2326 = vadd.f32 %v2318, 1.0
  %v2327 = vadd.f32 %v2319, 1.0
  %v2328 = vadd.f32 %v2320, 1.0
  %v2329 = vadd.f32 %v2321, 1.0
  %v2330 = vadd.f32 %v2322, 1.0
  %v2331 = vrcp.pop %v2323
  %v2332 = vrcp.pop %v2324
  %v2333 = vrcp.pop %v2325
  %v2334 = vrcp.pop %v2326
  %v2335 = vrcp.pop %v2327
  %v2336 = vrcp.pop %v2328
  %v2337 = vrcp.pop %v2329
  %v2338 = vrcp.pop %v2330
  %v2339 = vmul.f32 %v2331, 1.0614054
  %v2340 = vmul.f32 %v2332, 1.0614054
  %v2341 = vmul.f32 %v2333, 1.0614054
  %v2342 = vmul.f32 %v2334, 1.0614054
  %v2343 = vmul.f32 %v2335, 1.0614054
  %v2344 = vmul.f32 %v2336, 1.0614054
  %v2345 = vmul.f32 %v2337, 1.0614054
  %v2346 = vmul.f32 %v2338, 1.0614054
  %v2347 = vadd.f32 %v2339, -1.4531521
  %v2348 = vadd.f32 %v2340, -1.4531521
  %v2349 = vadd.f32 %v2341, -1.4531521
  %v2350 = vadd.f32 %v2342, -1.4531521
  %v2351 = vadd.f32 %v2343, -1.4531521
  %v2352 = vadd.f32 %v2344, -1.4531521
  %v2353 = vadd.f32 %v2345, -1.4531521
  %v2354 = vadd.f32 %v2346, -1.4531521
  %v2355 = vmul.f32 %v2347, %v2331
  %v2356 = vmul.f32 %v2348, %v2332
  %v2357 = vmul.f32 %v2349, %v2333
  %v2358 = vmul.f32 %v2350, %v2334
  %v2359 = vmul.f32 %v2351, %v2335
  %v2360 = vmul.f32 %v2352, %v2336
  %v2361 = vmul.f32 %v2353, %v2337
  %v2362 = vmul.f32 %v2354, %v2338
  %v2363 = vadd.f32 %v2355, 1.4214138
  %v2364 = vadd.f32 %v2356, 1.4214138
  %v2365 = vadd.f32 %v2357, 1.4214138
  %v2366 = vadd.f32 %v2358, 1.4214138
  %v2367 = vadd.f32 %v2359, 1.4214138
  %v2368 = vadd.f32 %v2360, 1.4214138
  %v2369 = vadd.f32 %v2361, 1.4214138
  %v2370 = vadd.f32 %v2362, 1.4214138
  %v2371 = vmul.f32 %v2363, %v2331
  %v2372 = vmul.f32 %v2364, %v2332
  %v2373 = vmul.f32 %v2365, %v2333
  %v2374 = vmul.f32 %v2366, %v2334
  %v2375 = vmul.f32 %v2367, %v2335
  %v2376 = vmul.f32 %v2368, %v2336
  %v2377 = vmul.f32 %v2369, %v2337
  %v2378 = vmul.f32 %v2370, %v2338
  %v2379 = vadd.f32 %v2371, -0.28449672
  %v2380 = vadd.f32 %v2372, -0.28449672
  %v2381 = vadd.f32 %v2373, -0.28449672
  %v2382 = vadd.f32 %v2374, -0.28449672
  %v2383 = vadd.f32 %v2375, -0.28449672
  %v2384 = vadd.f32 %v2376, -0.28449672
  %v2385 = vadd.f32 %v2377, -0.28449672
  %v2386 = vadd.f32 %v2378, -0.28449672
  %v2387 = vmul.f32 %v2379, %v2331
  %v2388 = vmul.f32 %v2380, %v2332
  %v2389 = vmul.f32 %v2381, %v2333
  %v2390 = vmul.f32 %v2382, %v2334
  %v2391 = vmul.f32 %v2383, %v2335
  %v2392 = vmul.f32 %v2384, %v2336
  %v2393 = vmul.f32 %v2385, %v2337
  %v2394 = vmul.f32 %v2386, %v2338
  %v2395 = vadd.f32 %v2387, 0.2548296
  %v2396 = vadd.f32 %v2388, 0.2548296
  %v2397 = vadd.f32 %v2389, 0.2548296
  %v2398 = vadd.f32 %v2390, 0.2548296
  %v2399 = vadd.f32 %v2391, 0.2548296
  %v2400 = vadd.f32 %v2392, 0.2548296
  %v2401 = vadd.f32 %v2393, 0.2548296
  %v2402 = vadd.f32 %v2394, 0.2548296
  %v2403 = vmul.f32 %v2395, %v2331
  %v2404 = vmul.f32 %v2396, %v2332
  %v2405 = vmul.f32 %v2397, %v2333
  %v2406 = vmul.f32 %v2398, %v2334
  %v2407 = vmul.f32 %v2399, %v2335
  %v2408 = vmul.f32 %v2400, %v2336
  %v2409 = vmul.f32 %v2401, %v2337
  %v2410 = vmul.f32 %v2402, %v2338
  %v2411 = vsub.f32 0.0, %v2307
  %v2412 = vsub.f32 0.0, %v2308
  %v2413 = vsub.f32 0.0, %v2309
  %v2414 = vsub.f32 0.0, %v2310
  %v2415 = vsub.f32 0.0, %v2311
  %v2416 = vsub.f32 0.0, %v2312
  %v2417 = vsub.f32 0.0, %v2313
  %v2418 = vsub.f32 0.0, %v2314
  %v2419 = vmul.f32 %v2411, %v2307
  %v2420 = vmul.f32 %v2412, %v2308
  %v2421 = vmul.f32 %v2413, %v2309
  %v2422 = vmul.f32 %v2414, %v2310
  %v2423 = vmul.f32 %v2415, %v2311
  %v2424 = vmul.f32 %v2416, %v2312
  %v2425 = vmul.f32 %v2417, %v2313
  %v2426 = vmul.f32 %v2418, %v2314
  %v2427 = vmul.f32 %v2419, 1.442695
  %v2428 = vpow.pop %v2427
  %v2429 = vmul.f32 %v2420, 1.442695
  %v2430 = vpow.pop %v2429
  %v2431 = vmul.f32 %v2421, 1.442695
  %v2432 = vpow.pop %v2431
  %v2433 = vmul.f32 %v2422, 1.442695
  %v2434 = vpow.pop %v2433
  %v2435 = vmul.f32 %v2423, 1.442695
  %v2436 = vpow.pop %v2435
  %v2437 = vmul.f32 %v2424, 1.442695
  %v2438 = vpow.pop %v2437
  %v2439 = vmul.f32 %v2425, 1.442695
  %v2440 = vpow.pop %v2439
  %v2441 = vmul.f32 %v2426, 1.442695
  %v2442 = vpow.pop %v2441
  %v2443 = vmul.f32 %v2403, %v2428
  %v2444 = vmul.f32 %v2404, %v2430
  %v2445 = vmul.f32 %v2405, %v2432
  %v2446 = vmul.f32 %v2406, %v2434
  %v2447 = vmul.f32 %v2407, %v2436
  %v2448 = vmul.f32 %v2408, %v2438
  %v2449 = vmul.f32 %v2409, %v2440
  %v2450 = vmul.f32 %v2410, %v2442
  %v2451 = vsub.f32 1.0, %v2443
  %v2452 = vsub.f32 1.0, %v2444
  %v2453 = vsub.f32 1.0, %v2445
  %v2454 = vsub.f32 1.0, %v2446
  %v2455 = vsub.f32 1.0, %v2447
  %v2456 = vsub.f32 1.0, %v2448
  %v2457 = vsub.f32 1.0, %v2449
  %v2458 = vsub.f32 1.0, %v2450
  %vm2459 = vcmp.ge.f32.partialorder %v2299, 0.0
  %vm2460 = vcmp.ge.f32.partialorder %v2300, 0.0
  %vm2461 = vcmp.ge.f32.partialorder %v2301, 0.0
  %vm2462 = vcmp.ge.f32.partialorder %v2302, 0.0
  %vm2463 = vcmp.ge.f32.partialorder %v2303, 0.0
  %vm2464 = vcmp.ge.f32.partialorder %v2304, 0.0
  %vm2465 = vcmp.ge.f32.partialorder %v2305, 0.0
  %vm2466 = vcmp.ge.f32.partialorder %v2306, 0.0
  %v2467 = vsub.f32 0.0, %v2451
  %v2468 = vsub.f32 0.0, %v2452
  %v2469 = vsub.f32 0.0, %v2453
  %v2470 = vsub.f32 0.0, %v2454
  %v2471 = vsub.f32 0.0, %v2455
  %v2472 = vsub.f32 0.0, %v2456
  %v2473 = vsub.f32 0.0, %v2457
  %v2474 = vsub.f32 0.0, %v2458
  %v2475 = vsel %vm2459, %v2451, %v2467
  %v2476 = vsel %vm2460, %v2452, %v2468
  %v2477 = vsel %vm2461, %v2453, %v2469
  %v2478 = vsel %vm2462, %v2454, %v2470
  %v2479 = vsel %vm2463, %v2455, %v2471
  %v2480 = vsel %vm2464, %v2456, %v2472
  %v2481 = vsel %vm2465, %v2457, %v2473
  %v2482 = vsel %vm2466, %v2458, %v2474
  %v2483 = vadd.f32 %v2475, 1.0
  %v2484 = vadd.f32 %v2476, 1.0
  %v2485 = vadd.f32 %v2477, 1.0
  %v2486 = vadd.f32 %v2478, 1.0
  %v2487 = vadd.f32 %v2479, 1.0
  %v2488 = vadd.f32 %v2480, 1.0
  %v2489 = vadd.f32 %v2481, 1.0
  %v2490 = vadd.f32 %v2482, 1.0
  %v2491 = vmul.f32 %v2291, %v2483
  %v2492 = vmul.f32 %v2292, %v2484
  %v2493 = vmul.f32 %v2293, %v2485
  %v2494 = vmul.f32 %v2294, %v2486
  %v2495 = vmul.f32 %v2295, %v2487
  %v2496 = vmul.f32 %v2296, %v2488
  %v2497 = vmul.f32 %v2297, %v2489
  %v2498 = vmul.f32 %v2298, %v2490
  %s2499 = scalar_lea.vmem %s4, 64
  %2500 = vst [vmem:[%s2499] sm:$0xff] %v2491
  %2501 = vst [vmem:[%s2499 + $0x8] sm:$0xff] %v2492
  %2502 = vst [vmem:[%s2499 + $0x10] sm:$0xff] %v2493
  %2503 = vst [vmem:[%s2499 + $0x18] sm:$0xff] %v2494
  %2504 = vst [vmem:[%s2499 + $0x20] sm:$0xff] %v2495
  %2505 = vst [vmem:[%s2499 + $0x28] sm:$0xff] %v2496
  %2506 = vst [vmem:[%s2499 + $0x30] sm:$0xff] %v2497
  %2507 = vst [vmem:[%s2499 + $0x38] sm:$0xff] %v2498
  // Predicated region
  $region18: #{_lambda_.1} parent=0 // pred_check
    _
  $region19: #{_lambda_.1} parent=0 // pred_check_branch
    %2509 = sbr.rel (0) target = $region21
  $region20: #{_lambda_.1} parent=0 // pred_region
    _
  $region21: #{_lambda_.1} parent=0 // pred_fallthru
    _
  // Predicated region
  $region22: #{_lambda_.1} parent=0 // pred_check
    _
  $region23: #{_lambda_.1} parent=0 // pred_check_branch
    %2511 = sbr.rel (0) target = $region25
  $region24: #{_lambda_.1} parent=0 // pred_region
    _
  $region25: #{_lambda_.1} parent=0 // pred_fallthru
    _

</llo_original>
